<compile_context>
chip_gen: v5e
topology: v5e:2x2
jax: 0.10.0
libtpu: 0.0.40
codegen_flags: <defaults>
</compile_context>

<pallas_src>
import functools
import math

import jax
import jax.numpy as jnp
from jax.experimental import pallas as pl
from jax.experimental.pallas import tpu as pltpu


# ----------------------------------------------------------------------------
# Generation-aware sizing
# ----------------------------------------------------------------------------
def _vmem_and_tiles():
    try:
        vmem = int(pltpu.get_tpu_info().vmem_capacity_bytes)
    except Exception:
        vmem = 64 * 1024 * 1024          # unknown -> assume v7x-like (64 MiB)
    if vmem >= 128 * 1024 * 1024:
        # v5e / v6e: 128 MiB VMEM -> larger scoped limit, bigger matmul tiles
        return 100 * 1024 * 1024, (512, 512, 1024)
    # v7x (64 MiB per TC) or unknown: conservative
    return 48 * 1024 * 1024, (256, 256, 512)


_VMEM_LIMIT_BYTES, _TILE_TARGETS = _vmem_and_tiles()


def _round_up(x, m):
    return (x + m - 1) // m * m


def _pick_tile(dim, target, align):
    """Largest tile <= target that is a multiple of `align` and divides `dim`;
    falls back to the full dim (always legal: equal to full array dim)."""
    if dim <= target:
        return dim
    t = (target // align) * align
    while t >= align:
        if dim % t == 0:
            return t
        t -= align
    return dim


def _row_tiling(M, target):
    """Row tiling with padding instead of a degenerate full-M fallback."""
    if M <= target:
        return M, M
    return target, _round_up(M, target)


def _maybe_pad_rows(a, m_pad):
    if a.shape[0] == m_pad:
        return a
    return jnp.pad(a, ((0, m_pad - a.shape[0]), (0, 0)))


# ----------------------------------------------------------------------------
# Pallas kernels
# ----------------------------------------------------------------------------
def _linear_kernel(x_ref, w_ref, b_ref, o_ref, acc_ref, *, apply_relu):
    # Tiled  o = relu?(x @ w + b);  K is the last ("arbitrary") grid axis.
    @pl.when(pl.program_id(2) == 0)
    def _():
        acc_ref[...] = jnp.zeros_like(acc_ref)

    acc_ref[...] += jnp.dot(
        x_ref[...].astype(jnp.bfloat16),          # no-op if LHS already bf16
        w_ref[...],                               # weights stored bf16
        preferred_element_type=jnp.float32,       # f32 accumulation
    )

    @pl.when(pl.program_id(2) == pl.num_programs(2) - 1)
    def _():
        y = acc_ref[...] + b_ref[...]
        if apply_relu:
            y = jnp.maximum(y, 0.0)
        o_ref[...] = y.astype(o_ref.dtype)


def _linear_res_noise_kernel(x_ref, w_ref, b_ref, res_ref, noise_ref,
                             o_ref, acc_ref):
    # Tiled  o = (x @ w + b) + res + noise   (liner2 + residual + torch.normal)
    @pl.when(pl.program_id(2) == 0)
    def _():
        acc_ref[...] = jnp.zeros_like(acc_ref)

    acc_ref[...] += jnp.dot(
        x_ref[...].astype(jnp.bfloat16), w_ref[...],
        preferred_element_type=jnp.float32,
    )

    @pl.when(pl.program_id(2) == pl.num_programs(2) - 1)
    def _():
        o_ref[...] = acc_ref[...] + b_ref[...] + res_ref[...] + noise_ref[...]


def _flash_attn_kernel(q_ref, k_ref, v_ref, o_ref, m_sc, l_sc, acc_sc):
    # grid = (B, H, T//tq, T//tkv); online softmax over the kv axis (last).
    # 1/sqrt(dk) is already folded into the Q projection weights.
    ki = pl.program_id(3)

    @pl.when(ki == 0)
    def _():
        m_sc[...] = jnp.full_like(m_sc, -jnp.inf)
        l_sc[...] = jnp.zeros_like(l_sc)
        acc_sc[...] = jnp.zeros_like(acc_sc)

    q = q_ref[0, 0]                                   # (tq, dk)  bf16
    k = k_ref[0, 0]                                   # (tkv, dk) bf16
    v = v_ref[0, 0]                                   # (tkv, dk) bf16

    s = jax.lax.dot_general(q, k, (((1,), (1,)), ((), ())),
                            preferred_element_type=jnp.float32)   # (tq, tkv)

    m_prev = m_sc[...]
    m_new = jnp.maximum(m_prev, jnp.max(s, axis=-1, keepdims=True))
    alpha = jnp.exp(m_prev - m_new)
    p = jnp.exp(s - m_new)
    l_sc[...] = alpha * l_sc[...] + jnp.sum(p, axis=-1, keepdims=True)
    acc_sc[...] = alpha * acc_sc[...] + jnp.dot(
        p.astype(jnp.bfloat16), v, preferred_element_type=jnp.float32)
    m_sc[...] = m_new

    @pl.when(ki == pl.num_programs(3) - 1)
    def _():
        inv = pl.reciprocal(l_sc[...], approx=True)
        o_ref[0, 0] = (acc_sc[...] * inv).astype(o_ref.dtype)


def _residual_ln_kernel(x_ref, res_ref, g_ref, b_ref, o_ref, *, eps):
    # y = LayerNorm(x + res) * gamma + beta      (f32 statistics)
    y = x_ref[...].astype(jnp.float32) + res_ref[...]
    mu = jnp.mean(y, axis=-1, keepdims=True)
    var = jnp.mean((y - mu) ** 2, axis=-1, keepdims=True)
    o_ref[...] = (y - mu) * jax.lax.rsqrt(var + eps) * g_ref[...] + b_ref[...]


# ----------------------------------------------------------------------------
# Pallas wrappers
# ----------------------------------------------------------------------------
def linear(x, w_bf16, b, *, relu=False, out_dtype=jnp.float32):
    M, K = x.shape
    N = w_bf16.shape[1]
    tm_t, tn_t, tk_t = _TILE_TARGETS
    tm, m_pad = _row_tiling(M, tm_t)
    tn = _pick_tile(N, tn_t, 128)
    tk = _pick_tile(K, tk_t, 128)
    x_p = _maybe_pad_rows(x, m_pad)
    grid = (m_pad // tm, N // tn, K // tk)
    out = pl.pallas_call(
        functools.partial(_linear_kernel, apply_relu=relu),
        out_shape=jax.ShapeDtypeStruct((m_pad, N), out_dtype),
        grid_spec=pltpu.PrefetchScalarGridSpec(
            num_scalar_prefetch=0,
            grid=grid,
            in_specs=[
                pl.BlockSpec((tm, tk), lambda i, j, k: (i, k)),
                pl.BlockSpec((tk, tn), lambda i, j, k: (k, j)),
                pl.BlockSpec((1, tn), lambda i, j, k: (0, j)),
            ],
            out_specs=pl.BlockSpec((tm, tn), lambda i, j, k: (i, j)),
            scratch_shapes=[pltpu.VMEM((tm, tn), jnp.float32)],
        ),
        compiler_params=pltpu.CompilerParams(
            dimension_semantics=("parallel", "parallel", "arbitrary"),
            vmem_limit_bytes=_VMEM_LIMIT_BYTES,
        ),
    )(x_p, w_bf16, b)
    return out[:M] if m_pad != M else out


def linear_residual_noise(x, w_bf16, b, res, noise):
    M, K = x.shape
    N = w_bf16.shape[1]
    tm_t, tn_t, tk_t = _TILE_TARGETS
    tm, m_pad = _row_tiling(M, tm_t)
    tn = _pick_tile(N, tn_t, 128)
    tk = _pick_tile(K, tk_t, 128)
    x_p = _maybe_pad_rows(x, m_pad)
    res_p = _maybe_pad_rows(res, m_pad)
    noise_p = _maybe_pad_rows(noise, m_pad)
    grid = (m_pad // tm, N // tn, K // tk)
    out = pl.pallas_call(
        _linear_res_noise_kernel,
        out_shape=jax.ShapeDtypeStruct((m_pad, N), jnp.float32),
        grid_spec=pltpu.PrefetchScalarGridSpec(
            num_scalar_prefetch=0,
            grid=grid,
            in_specs=[
                pl.BlockSpec((tm, tk), lambda i, j, k: (i, k)),
                pl.BlockSpec((tk, tn), lambda i, j, k: (k, j)),
                pl.BlockSpec((1, tn), lambda i, j, k: (0, j)),
                pl.BlockSpec((tm, tn), lambda i, j, k: (i, j)),
                pl.BlockSpec((tm, tn), lambda i, j, k: (i, j)),
            ],
            out_specs=pl.BlockSpec((tm, tn), lambda i, j, k: (i, j)),
            scratch_shapes=[pltpu.VMEM((tm, tn), jnp.float32)],
        ),
        compiler_params=pltpu.CompilerParams(
            dimension_semantics=("parallel", "parallel", "arbitrary"),
            vmem_limit_bytes=_VMEM_LIMIT_BYTES,
        ),
    )(x_p, w_bf16, b, res_p, noise_p)
    return out[:M] if m_pad != M else out


def residual_layernorm(x, res, gamma, beta, *, eps=1e-5):
    M, E = x.shape
    tm, m_pad = _row_tiling(M, _TILE_TARGETS[0])
    x_p = _maybe_pad_rows(x, m_pad)
    res_p = _maybe_pad_rows(res, m_pad)
    out = pl.pallas_call(
        functools.partial(_residual_ln_kernel, eps=eps),
        out_shape=jax.ShapeDtypeStruct((m_pad, E), jnp.float32),
        grid_spec=pltpu.PrefetchScalarGridSpec(
            num_scalar_prefetch=0,
            grid=(m_pad // tm,),
            in_specs=[
                pl.BlockSpec((tm, E), lambda i: (i, 0)),
                pl.BlockSpec((tm, E), lambda i: (i, 0)),
                pl.BlockSpec((1, E), lambda i: (0, 0)),
                pl.BlockSpec((1, E), lambda i: (0, 0)),
            ],
            out_specs=pl.BlockSpec((tm, E), lambda i: (i, 0)),
        ),
        compiler_params=pltpu.CompilerParams(
            dimension_semantics=("parallel",),
            vmem_limit_bytes=_VMEM_LIMIT_BYTES,
        ),
    )(x_p, res_p, gamma, beta)
    return out[:M] if m_pad != M else out


def multihead_attention_block(p, x_flat, B, T, num_heads, emb_size):
    dk = emb_size // num_heads
    # One fused (E, 3E) projection (activation read once), bf16 output slab.
    qkv = linear(x_flat, p["wqkv"], p["bqkv"], relu=True,
                 out_dtype=jnp.bfloat16)                        # (B*T, 3E) bf16
    # Head-major layout: pure layout plumbing in the wrapper so the attention
    # kernel slices heads along leading dims (no lane-dim head slicing).
    qkv = qkv.reshape(B, T, 3, num_heads, dk).transpose(2, 0, 3, 1, 4)
    q, k, v = qkv[0], qkv[1], qkv[2]                            # (B, H, T, dk)

    tq = _pick_tile(T, 256, 8)
    tkv = _pick_tile(T, 256, 8)
    att = pl.pallas_call(
        _flash_attn_kernel,
        out_shape=jax.ShapeDtypeStruct((B, num_heads, T, dk), jnp.bfloat16),
        grid_spec=pltpu.PrefetchScalarGridSpec(
            num_scalar_prefetch=0,
            grid=(B, num_heads, T // tq, T // tkv),
            in_specs=[
                pl.BlockSpec((1, 1, tq, dk), lambda b, h, qi, ki: (b, h, qi, 0)),
                pl.BlockSpec((1, 1, tkv, dk), lambda b, h, qi, ki: (b, h, ki, 0)),
                pl.BlockSpec((1, 1, tkv, dk), lambda b, h, qi, ki: (b, h, ki, 0)),
            ],
            out_specs=pl.BlockSpec((1, 1, tq, dk),
                                   lambda b, h, qi, ki: (b, h, qi, 0)),
            scratch_shapes=[
                pltpu.VMEM((tq, 1), jnp.float32),     # running max m
                pltpu.VMEM((tq, 1), jnp.float32),     # running sum l
                pltpu.VMEM((tq, dk), jnp.float32),    # output accumulator
            ],
        ),
        compiler_params=pltpu.CompilerParams(
            dimension_semantics=("parallel", "parallel", "parallel", "arbitrary"),
            vmem_limit_bytes=_VMEM_LIMIT_BYTES,
        ),
    )(q, k, v)

    # back to (B*T, E) rows-x-features, then fused residual + LayerNorm
    att = att.transpose(0, 2, 1, 3).reshape(B * T, emb_size)
    return residual_layernorm(att, x_flat, p["ln_g"], p["ln_b"])


# ----------------------------------------------------------------------------
# Glue (plain JAX)
# ----------------------------------------------------------------------------
def positional_encoding(T, E):
    pos = jnp.arange(T, dtype=jnp.float32)[:, None]
    i = jnp.arange(E)[None, :]
    rates = 1.0 / jnp.power(10000.0, (2 * (i // 2)).astype(jnp.float32) / E)
    ang = pos * rates
    return jnp.where(i % 2 == 0, jnp.sin(ang), jnp.cos(ang)).astype(jnp.float32)


@functools.partial(jax.jit, static_argnames=("num_encoders", "num_heads",
                                             "emb_size"))
def encoder_forward(params, x, noise_key, *, num_encoders, num_heads, emb_size):
    B, T = x.shape
    # embedding row 0 zeroed once at init (zero_pad=True); scale = sqrt(E)
    enc = jnp.take(params["emb"], x, axis=0) * jnp.sqrt(jnp.float32(emb_size))
    enc = enc + positional_encoding(T, emb_size)[None]
    enc = enc.reshape(B * T, emb_size)
    for i in range(num_encoders):
        lp = params["layers"][i]
        att = multihead_attention_block(lp["attn"], enc, B, T,
                                        num_heads, emb_size)
        # feedFworad: relu(x@W1+b1) @ W2 + b2, += residual, torch.normal(.)
        # TODO(synk): noise is generated host-side with jax.random.normal and
        # fused in the matmul epilogue (in-kernel pltpu PRNG avoided for
        # interpret-mode portability); on-HW pltpu.stateful_normal is an option.
        noise = jax.random.normal(jax.random.fold_in(noise_key, i),
                                  (B * T, emb_size), jnp.float32)
        h = linear(att, lp["ffn"]["w1"], lp["ffn"]["b1"], relu=True,
                   out_dtype=jnp.bfloat16)                      # (B*T, 4E) bf16
        enc = linear_residual_noise(h, lp["ffn"]["w2"], lp["ffn"]["b2"],
                                    att, noise)
    return enc.reshape(B, T, emb_size)


# ----------------------------------------------------------------------------
# Deterministic parameter init (shapes implied by the module __init__)
# ----------------------------------------------------------------------------
def init_params(key, num_de, num_encoders, emb_size, num_heads):
    dk = emb_size // num_heads
    q_scale = 1.0 / math.sqrt(dk)

    def dense(k, fan_in, fan_out):
        kw, kb = jax.random.split(k)
        lim = 1.0 / math.sqrt(fan_in)
        w = jax.random.uniform(kw, (fan_in, fan_out), jnp.float32, -lim, lim)
        b = jax.random.uniform(kb, (1, fan_out), jnp.float32, -lim, lim)
        return w, b

    keys = jax.random.split(key, 1 + num_encoders)
    emb = jax.random.normal(keys[0], (num_de, emb_size), jnp.float32) * 0.02
    emb = emb.at[0].set(0.0)                    # zero_pad applied once at init

    layers = []
    for h in range(num_encoders):
        ks = jax.random.split(keys[1 + h], 5)
        wq, bq = dense(ks[0], emb_size, emb_size)
        wk, bk = dense(ks[1], emb_size, emb_size)
        wv, bv = dense(ks[2], emb_size, emb_size)
        w1, b1 = dense(ks[3], emb_size, 4 * emb_size)
        w2, b2 = dense(ks[4], 4 * emb_size, emb_size)
        # fold softmax 1/sqrt(dk) into the Q projection (exact: relu is
        # positively homogeneous), so the attention kernel does no scaling.
        wq = wq * q_scale
        bq = bq * q_scale
        layers.append({
            "attn": {
                "wqkv": jnp.concatenate([wq, wk, wv], axis=1).astype(jnp.bfloat16),
                "bqkv": jnp.concatenate([bq, bk, bv], axis=1),
                "ln_g": jnp.ones((1, emb_size), jnp.float32),
                "ln_b": jnp.zeros((1, emb_size), jnp.float32),
            },
            "ffn": {
                "w1": w1.astype(jnp.bfloat16), "b1": b1,
                "w2": w2.astype(jnp.bfloat16), "b2": b2,
            },
        })
    return {"emb": emb, "layers": layers}


# ----------------------------------------------------------------------------
if __name__ == "__main__":
    NUM_DE = 16        # vocab size
    NUM_ENCODERS = 2
    EMB_SIZE = 32
    NUM_HEADS = 4
    B, T = 2, 8

    root = jax.random.PRNGKey(0)
    k_param, k_tok, k_noise = jax.random.split(root, 3)

    params = init_params(k_param, NUM_DE, NUM_ENCODERS, EMB_SIZE, NUM_HEADS)
    x = jax.random.randint(k_tok, (B, T), 0, NUM_DE, dtype=jnp.int32)

    out = encoder_forward(
        params, x, k_noise,
        num_encoders=NUM_ENCODERS, num_heads=NUM_HEADS, emb_size=EMB_SIZE,
    )
    out = jax.block_until_ready(out)
    assert out.shape == (B, T, EMB_SIZE) and out.dtype == jnp.float32
    assert bool(jnp.all(jnp.isfinite(out)))
    print("KERNEL_OK")
</pallas_src>

<mosaic_0001>
module attributes {stable_mosaic.version = 11 : i64} {
  func.func @_linear_kernel(%arg0: i32, %arg1: i32, %arg2: i32, %arg3: memref<16x32xf32, #tpu.memory_space<vmem>>, %arg4: memref<32x96xbf16, #tpu.memory_space<vmem>>, %arg5: memref<1x96xf32, #tpu.memory_space<vmem>>, %arg6: memref<16x96xbf16, #tpu.memory_space<vmem>>, %arg7: memref<16x96xf32, #tpu.memory_space<vmem>>) attributes {dimension_semantics = [#tpu.dimension_semantics<parallel>, #tpu.dimension_semantics<parallel>, #tpu.dimension_semantics<arbitrary>], iteration_bounds = array<i64: 1, 1, 1>, scalar_prefetch = 0 : i64, scratch_operands = 1 : i64, tpu.core_type = #tpu.core_type<tc>, window_params = [{transform_indices = @transform_0, window_bounds = array<i64: 16, 32>}, {transform_indices = @transform_1, window_bounds = array<i64: 32, 96>}, {transform_indices = @transform_2, window_bounds = array<i64: 1, 96>}, {transform_indices = @transform_3, window_bounds = array<i64: 16, 96>}]} {
    %c0_i32 = arith.constant 0 : i32
    %0 = arith.cmpi eq, %arg2, %c0_i32 : i32
    %1 = arith.extui %0 : i1 to i32
    %c0_i32_0 = arith.constant 0 : i32
    %2 = arith.cmpi ne, %1, %c0_i32_0 : i32
    scf.if %2 {
      %cst_10 = arith.constant 0.000000e+00 : f32
      %13 = vector.broadcast %cst_10 : f32 to vector<16x96xf32>
      %c0_11 = arith.constant 0 : index
      %c0_12 = arith.constant 0 : index
      %14 = vector.load %arg7[%c0_11, %c0_12] : memref<16x96xf32, #tpu.memory_space<vmem>>, vector<16x96xf32>
      tpu.vector_store %arg7[%c0_11, %c0_12], %13 {strides = array<i32>} : memref<16x96xf32, #tpu.memory_space<vmem>>, vector<16x96xf32>,
    } else {
    }
    %c0 = arith.constant 0 : index
    %c0_1 = arith.constant 0 : index
    %3 = vector.load %arg7[%c0, %c0_1] : memref<16x96xf32, #tpu.memory_space<vmem>>, vector<16x96xf32>
    %c0_2 = arith.constant 0 : index
    %c0_3 = arith.constant 0 : index
    %4 = vector.load %arg3[%c0_2, %c0_3] : memref<16x32xf32, #tpu.memory_space<vmem>>, vector<16x32xf32>
    %5 = arith.truncf %4 : vector<16x32xf32> to vector<16x32xbf16>
    %c0_4 = arith.constant 0 : index
    %c0_5 = arith.constant 0 : index
    %6 = vector.load %arg4[%c0_4, %c0_5] : memref<32x96xbf16, #tpu.memory_space<vmem>>, vector<32x96xbf16>
    %cst = arith.constant dense<0.000000e+00> : vector<16x96xf32>
    %7 = tpu.matmul %5, %6, %cst {dimension_numbers = #tpu.dot_dimension_numbers<[1], [0], [0], [1], [0, 0, 1, 1], [], []>} : vector<16x32xbf16>, vector<32x96xbf16>, vector<16x96xf32> -> vector<16x96xf32>
    %8 = arith.addf %3, %7 : vector<16x96xf32>
    %c0_6 = arith.constant 0 : index
    %c0_7 = arith.constant 0 : index
    %9 = vector.load %arg7[%c0_6, %c0_7] : memref<16x96xf32, #tpu.memory_space<vmem>>, vector<16x96xf32>
    tpu.vector_store %arg7[%c0_6, %c0_7], %8 {strides = array<i32>} : memref<16x96xf32, #tpu.memory_space<vmem>>, vector<16x96xf32>,
    %c0_i32_8 = arith.constant 0 : i32
    %10 = arith.cmpi eq, %arg2, %c0_i32_8 : i32
    %11 = arith.extui %10 : i1 to i32
    %c0_i32_9 = arith.constant 0 : i32
    %12 = arith.cmpi ne, %11, %c0_i32_9 : i32
    scf.if %12 {
      %c0_10 = arith.constant 0 : index
      %c0_11 = arith.constant 0 : index
      %13 = vector.load %arg7[%c0_10, %c0_11] : memref<16x96xf32, #tpu.memory_space<vmem>>, vector<16x96xf32>
      %c0_12 = arith.constant 0 : index
      %c0_13 = arith.constant 0 : index
      %14 = vector.load %arg5[%c0_12, %c0_13] : memref<1x96xf32, #tpu.memory_space<vmem>>, vector<1x96xf32>
      %15 = vector.broadcast %14 : vector<1x96xf32> to vector<16x96xf32>
      %16 = arith.addf %13, %15 : vector<16x96xf32>
      %cst_14 = arith.constant 0.000000e+00 : f32
      %17 = vector.broadcast %cst_14 : f32 to vector<16x96xf32>
      %18 = arith.maximumf %16, %17 : vector<16x96xf32>
      %19 = arith.truncf %18 : vector<16x96xf32> to vector<16x96xbf16>
      %c0_15 = arith.constant 0 : index
      %c0_16 = arith.constant 0 : index
      %20 = vector.load %arg6[%c0_15, %c0_16] : memref<16x96xbf16, #tpu.memory_space<vmem>>, vector<16x96xbf16>
      tpu.vector_store %arg6[%c0_15, %c0_16], %19 {strides = array<i32>} : memref<16x96xbf16, #tpu.memory_space<vmem>>, vector<16x96xbf16>,
    } else {
    }
    return
  }
  func.func @transform_0(%arg0: i32, %arg1: i32, %arg2: i32) -> (i32, i32) {
    %c0_i32 = arith.constant 0 : i32
    return %arg0, %arg2 : i32, i32
  }
  func.func @transform_1(%arg0: i32, %arg1: i32, %arg2: i32) -> (i32, i32) {
    %c0_i32 = arith.constant 0 : i32
    return %arg2, %arg1 : i32, i32
  }
  func.func @transform_2(%arg0: i32, %arg1: i32, %arg2: i32) -> (i32, i32) {
    %c0_i32 = arith.constant 0 : i32
    %c0_i32_0 = arith.constant 0 : i32
    return %c0_i32, %arg1 : i32, i32
  }
  func.func @transform_3(%arg0: i32, %arg1: i32, %arg2: i32) -> (i32, i32) {
    %c0_i32 = arith.constant 0 : i32
    return %arg0, %arg1 : i32, i32
  }
}

module attributes {stable_mosaic.version = 11 : i64} {
  func.func @_flash_attn_kernel(%arg0: i32, %arg1: i32, %arg2: i32, %arg3: i32, %arg4: memref<1x1x8x8xbf16, #tpu.memory_space<vmem>>, %arg5: memref<1x1x8x8xbf16, #tpu.memory_space<vmem>>, %arg6: memref<1x1x8x8xbf16, #tpu.memory_space<vmem>>, %arg7: memref<1x1x8x8xbf16, #tpu.memory_space<vmem>>, %arg8: memref<8x1xf32, #tpu.memory_space<vmem>>, %arg9: memref<8x1xf32, #tpu.memory_space<vmem>>, %arg10: memref<8x8xf32, #tpu.memory_space<vmem>>) attributes {dimension_semantics = [#tpu.dimension_semantics<parallel>, #tpu.dimension_semantics<parallel>, #tpu.dimension_semantics<parallel>, #tpu.dimension_semantics<arbitrary>], iteration_bounds = array<i64: 2, 4, 1, 1>, scalar_prefetch = 0 : i64, scratch_operands = 3 : i64, tpu.core_type = #tpu.core_type<tc>, window_params = [{transform_indices = @transform_0, window_bounds = array<i64: 1, 1, 8, 8>}, {transform_indices = @transform_1, window_bounds = array<i64: 1, 1, 8, 8>}, {transform_indices = @transform_2, window_bounds = array<i64: 1, 1, 8, 8>}, {transform_indices = @transform_3, window_bounds = array<i64: 1, 1, 8, 8>}]} {
    %c0_i32 = arith.constant 0 : i32
    %0 = arith.cmpi eq, %arg3, %c0_i32 : i32
    %1 = arith.extui %0 : i1 to i32
    %c0_i32_0 = arith.constant 0 : i32
    %2 = arith.cmpi ne, %1, %c0_i32_0 : i32
    scf.if %2 {
      %cst_29 = arith.constant 0xFF800000 : f32
      %36 = vector.broadcast %cst_29 : f32 to vector<8x1xf32>
      %c0_30 = arith.constant 0 : index
      %c0_31 = arith.constant 0 : index
      %37 = vector.load %arg8[%c0_30, %c0_31] : memref<8x1xf32, #tpu.memory_space<vmem>>, vector<8x1xf32>
      tpu.vector_store %arg8[%c0_30, %c0_31], %36 {strides = array<i32>} : memref<8x1xf32, #tpu.memory_space<vmem>>, vector<8x1xf32>,
      %cst_32 = arith.constant 0.000000e+00 : f32
      %38 = vector.broadcast %cst_32 : f32 to vector<8x1xf32>
      %c0_33 = arith.constant 0 : index
      %c0_34 = arith.constant 0 : index
      %39 = vector.load %arg9[%c0_33, %c0_34] : memref<8x1xf32, #tpu.memory_space<vmem>>, vector<8x1xf32>
      tpu.vector_store %arg9[%c0_33, %c0_34], %38 {strides = array<i32>} : memref<8x1xf32, #tpu.memory_space<vmem>>, vector<8x1xf32>,
      %cst_35 = arith.constant 0.000000e+00 : f32
      %40 = vector.broadcast %cst_35 : f32 to vector<8x8xf32>
      %c0_36 = arith.constant 0 : index
      %c0_37 = arith.constant 0 : index
      %41 = vector.load %arg10[%c0_36, %c0_37] : memref<8x8xf32, #tpu.memory_space<vmem>>, vector<8x8xf32>
      tpu.vector_store %arg10[%c0_36, %c0_37], %40 {strides = array<i32>} : memref<8x8xf32, #tpu.memory_space<vmem>>, vector<8x8xf32>,
    } else {
    }
    %c0 = arith.constant 0 : index
    %c0_1 = arith.constant 0 : index
    %c0_2 = arith.constant 0 : index
    %c0_3 = arith.constant 0 : index
    %3 = vector.load %arg4[%c0, %c0_1, %c0_2, %c0_3] : memref<1x1x8x8xbf16, #tpu.memory_space<vmem>>, vector<1x1x8x8xbf16>
    %4 = vector.shape_cast %3 : vector<1x1x8x8xbf16> to vector<8x8xbf16>
    %c0_4 = arith.constant 0 : index
    %c0_5 = arith.constant 0 : index
    %c0_6 = arith.constant 0 : index
    %c0_7 = arith.constant 0 : index
    %5 = vector.load %arg5[%c0_4, %c0_5, %c0_6, %c0_7] : memref<1x1x8x8xbf16, #tpu.memory_space<vmem>>, vector<1x1x8x8xbf16>
    %6 = vector.shape_cast %5 : vector<1x1x8x8xbf16> to vector<8x8xbf16>
    %c0_8 = arith.constant 0 : index
    %c0_9 = arith.constant 0 : index
    %c0_10 = arith.constant 0 : index
    %c0_11 = arith.constant 0 : index
    %7 = vector.load %arg6[%c0_8, %c0_9, %c0_10, %c0_11] : memref<1x1x8x8xbf16, #tpu.memory_space<vmem>>, vector<1x1x8x8xbf16>
    %8 = vector.shape_cast %7 : vector<1x1x8x8xbf16> to vector<8x8xbf16>
    %cst = arith.constant dense<0.000000e+00> : vector<8x8xf32>
    %9 = tpu.matmul %4, %6, %cst {dimension_numbers = #tpu.dot_dimension_numbers<[1], [1], [0], [0], [0, 0, 1, 0], [], []>} : vector<8x8xbf16>, vector<8x8xbf16>, vector<8x8xf32> -> vector<8x8xf32>
    %c0_12 = arith.constant 0 : index
    %c0_13 = arith.constant 0 : index
    %10 = vector.load %arg8[%c0_12, %c0_13] : memref<8x1xf32, #tpu.memory_space<vmem>>, vector<8x1xf32>
    %cst_14 = arith.constant dense<0xFF800000> : vector<8xf32>
    %11 = vector.multi_reduction <maximumf>, %9, %cst_14 [1] : vector<8x8xf32> to vector<8xf32>
    %12 = vector.shape_cast %11 : vector<8xf32> to vector<8x1xf32>
    %13 = arith.maximumf %10, %12 : vector<8x1xf32>
    %14 = arith.subf %10, %13 : vector<8x1xf32>
    %15 = math.exp %14 : vector<8x1xf32>
    %16 = vector.broadcast %13 : vector<8x1xf32> to vector<8x8xf32>
    %17 = arith.subf %9, %16 : vector<8x8xf32>
    %18 = math.exp %17 : vector<8x8xf32>
    %c0_15 = arith.constant 0 : index
    %c0_16 = arith.constant 0 : index
    %19 = vector.load %arg9[%c0_15, %c0_16] : memref<8x1xf32, #tpu.memory_space<vmem>>, vector<8x1xf32>
    %20 = arith.mulf %15, %19 : vector<8x1xf32>
    %cst_17 = arith.constant dense<0.000000e+00> : vector<8xf32>
    %21 = vector.multi_reduction <add>, %18, %cst_17 [1] : vector<8x8xf32> to vector<8xf32>
    %22 = vector.shape_cast %21 : vector<8xf32> to vector<8x1xf32>
    %23 = arith.addf %20, %22 : vector<8x1xf32>
    %c0_18 = arith.constant 0 : index
    %c0_19 = arith.constant 0 : index
    %24 = vector.load %arg9[%c0_18, %c0_19] : memref<8x1xf32, #tpu.memory_space<vmem>>, vector<8x1xf32>
    tpu.vector_store %arg9[%c0_18, %c0_19], %23 {strides = array<i32>} : memref<8x1xf32, #tpu.memory_space<vmem>>, vector<8x1xf32>,
    %c0_20 = arith.constant 0 : index
    %c0_21 = arith.constant 0 : index
    %25 = vector.load %arg10[%c0_20, %c0_21] : memref<8x8xf32, #tpu.memory_space<vmem>>, vector<8x8xf32>
    %26 = vector.broadcast %15 : vector<8x1xf32> to vector<8x8xf32>
    %27 = arith.mulf %26, %25 : vector<8x8xf32>
    %28 = arith.truncf %18 : vector<8x8xf32> to vector<8x8xbf16>
    %cst_22 = arith.constant dense<0.000000e+00> : vector<8x8xf32>
    %29 = tpu.matmul %28, %8, %cst_22 {dimension_numbers = #tpu.dot_dimension_numbers<[1], [0], [0], [1], [0, 0, 1, 1], [], []>} : vector<8x8xbf16>, vector<8x8xbf16>, vector<8x8xf32> -> vector<8x8xf32>
    %30 = arith.addf %27, %29 : vector<8x8xf32>
    %c0_23 = arith.constant 0 : index
    %c0_24 = arith.constant 0 : index
    %31 = vector.load %arg10[%c0_23, %c0_24] : memref<8x8xf32, #tpu.memory_space<vmem>>, vector<8x8xf32>
    tpu.vector_store %arg10[%c0_23, %c0_24], %30 {strides = array<i32>} : memref<8x8xf32, #tpu.memory_space<vmem>>, vector<8x8xf32>,
    %c0_25 = arith.constant 0 : index
    %c0_26 = arith.constant 0 : index
    %32 = vector.load %arg8[%c0_25, %c0_26] : memref<8x1xf32, #tpu.memory_space<vmem>>, vector<8x1xf32>
    tpu.vector_store %arg8[%c0_25, %c0_26], %13 {strides = array<i32>} : memref<8x1xf32, #tpu.memory_space<vmem>>, vector<8x1xf32>,
    %c0_i32_27 = arith.constant 0 : i32
    %33 = arith.cmpi eq, %arg3, %c0_i32_27 : i32
    %34 = arith.extui %33 : i1 to i32
    %c0_i32_28 = arith.constant 0 : i32
    %35 = arith.cmpi ne, %34, %c0_i32_28 : i32
    scf.if %35 {
      %c0_29 = arith.constant 0 : index
      %c0_30 = arith.constant 0 : index
      %36 = vector.load %arg9[%c0_29, %c0_30] : memref<8x1xf32, #tpu.memory_space<vmem>>, vector<8x1xf32>
      %37 = tpu.reciprocal %36 {approx = true} : vector<8x1xf32> -> vector<8x1xf32>
      %c0_31 = arith.constant 0 : index
      %c0_32 = arith.constant 0 : index
      %38 = vector.load %arg10[%c0_31, %c0_32] : memref<8x8xf32, #tpu.memory_space<vmem>>, vector<8x8xf32>
      %39 = vector.broadcast %37 : vector<8x1xf32> to vector<8x8xf32>
      %40 = arith.mulf %38, %39 : vector<8x8xf32>
      %41 = arith.truncf %40 : vector<8x8xf32> to vector<8x8xbf16>
      %c0_33 = arith.constant 0 : index
      %c0_34 = arith.constant 0 : index
      %c0_35 = arith.constant 0 : index
      %c0_36 = arith.constant 0 : index
      %42 = vector.load %arg7[%c0_33, %c0_34, %c0_35, %c0_36] : memref<1x1x8x8xbf16, #tpu.memory_space<vmem>>, vector<1x1x8x8xbf16>
      %43 = vector.shape_cast %42 : vector<1x1x8x8xbf16> to vector<8x8xbf16>
      %44 = vector.shape_cast %41 : vector<8x8xbf16> to vector<1x1x8x8xbf16>
      tpu.vector_store %arg7[%c0_33, %c0_34, %c0_35, %c0_36], %44 {strides = array<i32>} : memref<1x1x8x8xbf16, #tpu.memory_space<vmem>>, vector<1x1x8x8xbf16>,
    } else {
    }
    return
  }
  func.func @transform_0(%arg0: i32, %arg1: i32, %arg2: i32, %arg3: i32) -> (i32, i32, i32, i32) {
    %c0_i32 = arith.constant 0 : i32
    %c0_i32_0 = arith.constant 0 : i32
    return %arg0, %arg1, %arg2, %c0_i32 : i32, i32, i32, i32
  }
  func.func @transform_1(%arg0: i32, %arg1: i32, %arg2: i32, %arg3: i32) -> (i32, i32, i32, i32) {
    %c0_i32 = arith.constant 0 : i32
    %c0_i32_0 = arith.constant 0 : i32
    return %arg0, %arg1, %arg3, %c0_i32 : i32, i32, i32, i32
  }
  func.func @transform_2(%arg0: i32, %arg1: i32, %arg2: i32, %arg3: i32) -> (i32, i32, i32, i32) {
    %c0_i32 = arith.constant 0 : i32
    %c0_i32_0 = arith.constant 0 : i32
    return %arg0, %arg1, %arg3, %c0_i32 : i32, i32, i32, i32
  }
  func.func @transform_3(%arg0: i32, %arg1: i32, %arg2: i32, %arg3: i32) -> (i32, i32, i32, i32) {
    %c0_i32 = arith.constant 0 : i32
    %c0_i32_0 = arith.constant 0 : i32
    return %arg0, %arg1, %arg2, %c0_i32 : i32, i32, i32, i32
  }
}

module attributes {stable_mosaic.version = 11 : i64} {
  func.func @_residual_ln_kernel(%arg0: i32, %arg1: memref<16x32xbf16, #tpu.memory_space<vmem>>, %arg2: memref<16x32xf32, #tpu.memory_space<vmem>>, %arg3: memref<1x32xf32, #tpu.memory_space<vmem>>, %arg4: memref<1x32xf32, #tpu.memory_space<vmem>>, %arg5: memref<16x32xf32, #tpu.memory_space<vmem>>) attributes {dimension_semantics = [#tpu.dimension_semantics<parallel>], iteration_bounds = array<i64: 1>, scalar_prefetch = 0 : i64, scratch_operands = 0 : i64, tpu.core_type = #tpu.core_type<tc>, window_params = [{transform_indices = @transform_0, window_bounds = array<i64: 16, 32>}, {transform_indices = @transform_1, window_bounds = array<i64: 16, 32>}, {pipeline_mode = #tpu.pipeline_mode<synchronous>, transform_indices = @transform_2, window_bounds = array<i64: 1, 32>}, {pipeline_mode = #tpu.pipeline_mode<synchronous>, transform_indices = @transform_3, window_bounds = array<i64: 1, 32>}, {transform_indices = @transform_4, window_bounds = array<i64: 16, 32>}]} {
    %c0 = arith.constant 0 : index
    %c0_0 = arith.constant 0 : index
    %0 = vector.load %arg1[%c0, %c0_0] : memref<16x32xbf16, #tpu.memory_space<vmem>>, vector<16x32xbf16>
    %1 = arith.extf %0 : vector<16x32xbf16> to vector<16x32xf32>
    %c0_1 = arith.constant 0 : index
    %c0_2 = arith.constant 0 : index
    %2 = vector.load %arg2[%c0_1, %c0_2] : memref<16x32xf32, #tpu.memory_space<vmem>>, vector<16x32xf32>
    %3 = arith.addf %1, %2 : vector<16x32xf32>
    %cst = arith.constant dense<0.000000e+00> : vector<16xf32>
    %4 = vector.multi_reduction <add>, %3, %cst [1] : vector<16x32xf32> to vector<16xf32>
    %5 = vector.shape_cast %4 : vector<16xf32> to vector<16x1xf32>
    %cst_3 = arith.constant 3.200000e+01 : f32
    %6 = vector.broadcast %cst_3 : f32 to vector<16x1xf32>
    %7 = arith.divf %5, %6 : vector<16x1xf32>
    %8 = vector.broadcast %7 : vector<16x1xf32> to vector<16x32xf32>
    %9 = arith.subf %3, %8 : vector<16x32xf32>
    %10 = arith.mulf %9, %9 : vector<16x32xf32>
    %cst_4 = arith.constant dense<0.000000e+00> : vector<16xf32>
    %11 = vector.multi_reduction <add>, %10, %cst_4 [1] : vector<16x32xf32> to vector<16xf32>
    %12 = vector.shape_cast %11 : vector<16xf32> to vector<16x1xf32>
    %cst_5 = arith.constant 3.200000e+01 : f32
    %13 = vector.broadcast %cst_5 : f32 to vector<16x1xf32>
    %14 = arith.divf %12, %13 : vector<16x1xf32>
    %15 = vector.broadcast %7 : vector<16x1xf32> to vector<16x32xf32>
    %16 = arith.subf %3, %15 : vector<16x32xf32>
    %cst_6 = arith.constant 9.99999974E-6 : f32
    %17 = vector.broadcast %cst_6 : f32 to vector<16x1xf32>
    %18 = arith.addf %14, %17 : vector<16x1xf32>
    %19 = math.rsqrt %18 : vector<16x1xf32>
    %20 = vector.broadcast %19 : vector<16x1xf32> to vector<16x32xf32>
    %21 = arith.mulf %16, %20 : vector<16x32xf32>
    %c0_7 = arith.constant 0 : index
    %c0_8 = arith.constant 0 : index
    %22 = vector.load %arg3[%c0_7, %c0_8] : memref<1x32xf32, #tpu.memory_space<vmem>>, vector<1x32xf32>
    %23 = vector.broadcast %22 : vector<1x32xf32> to vector<16x32xf32>
    %24 = arith.mulf %21, %23 : vector<16x32xf32>
    %c0_9 = arith.constant 0 : index
    %c0_10 = arith.constant 0 : index
    %25 = vector.load %arg4[%c0_9, %c0_10] : memref<1x32xf32, #tpu.memory_space<vmem>>, vector<1x32xf32>
    %26 = vector.broadcast %25 : vector<1x32xf32> to vector<16x32xf32>
    %27 = arith.addf %24, %26 : vector<16x32xf32>
    %c0_11 = arith.constant 0 : index
    %c0_12 = arith.constant 0 : index
    %28 = vector.load %arg5[%c0_11, %c0_12] : memref<16x32xf32, #tpu.memory_space<vmem>>, vector<16x32xf32>
    tpu.vector_store %arg5[%c0_11, %c0_12], %27 {strides = array<i32>} : memref<16x32xf32, #tpu.memory_space<vmem>>, vector<16x32xf32>,
    return
  }
  func.func @transform_0(%arg0: i32) -> (i32, i32) {
    %c0_i32 = arith.constant 0 : i32
    %c0_i32_0 = arith.constant 0 : i32
    return %arg0, %c0_i32 : i32, i32
  }
  func.func @transform_1(%arg0: i32) -> (i32, i32) {
    %c0_i32 = arith.constant 0 : i32
    %c0_i32_0 = arith.constant 0 : i32
    return %arg0, %c0_i32 : i32, i32
  }
  func.func @transform_2(%arg0: i32) -> (i32, i32) {
    %c0_i32 = arith.constant 0 : i32
    %c0_i32_0 = arith.constant 0 : i32
    %c0_i32_1 = arith.constant 0 : i32
    return %c0_i32, %c0_i32_0 : i32, i32
  }
  func.func @transform_3(%arg0: i32) -> (i32, i32) {
    %c0_i32 = arith.constant 0 : i32
    %c0_i32_0 = arith.constant 0 : i32
    %c0_i32_1 = arith.constant 0 : i32
    return %c0_i32, %c0_i32_0 : i32, i32
  }
  func.func @transform_4(%arg0: i32) -> (i32, i32) {
    %c0_i32 = arith.constant 0 : i32
    %c0_i32_0 = arith.constant 0 : i32
    return %arg0, %c0_i32 : i32, i32
  }
}

module attributes {stable_mosaic.version = 11 : i64} {
  func.func @_linear_kernel(%arg0: i32, %arg1: i32, %arg2: i32, %arg3: memref<16x32xf32, #tpu.memory_space<vmem>>, %arg4: memref<32x128xbf16, #tpu.memory_space<vmem>>, %arg5: memref<1x128xf32, #tpu.memory_space<vmem>>, %arg6: memref<16x128xbf16, #tpu.memory_space<vmem>>, %arg7: memref<16x128xf32, #tpu.memory_space<vmem>>) attributes {dimension_semantics = [#tpu.dimension_semantics<parallel>, #tpu.dimension_semantics<parallel>, #tpu.dimension_semantics<arbitrary>], iteration_bounds = array<i64: 1, 1, 1>, scalar_prefetch = 0 : i64, scratch_operands = 1 : i64, tpu.core_type = #tpu.core_type<tc>, window_params = [{transform_indices = @transform_0, window_bounds = array<i64: 16, 32>}, {transform_indices = @transform_1, window_bounds = array<i64: 32, 128>}, {transform_indices = @transform_2, window_bounds = array<i64: 1, 128>}, {transform_indices = @transform_3, window_bounds = array<i64: 16, 128>}]} {
    %c0_i32 = arith.constant 0 : i32
    %0 = arith.cmpi eq, %arg2, %c0_i32 : i32
    %1 = arith.extui %0 : i1 to i32
    %c0_i32_0 = arith.constant 0 : i32
    %2 = arith.cmpi ne, %1, %c0_i32_0 : i32
    scf.if %2 {
      %cst_10 = arith.constant 0.000000e+00 : f32
      %13 = vector.broadcast %cst_10 : f32 to vector<16x128xf32>
      %c0_11 = arith.constant 0 : index
      %c0_12 = arith.constant 0 : index
      %14 = vector.load %arg7[%c0_11, %c0_12] : memref<16x128xf32, #tpu.memory_space<vmem>>, vector<16x128xf32>
      tpu.vector_store %arg7[%c0_11, %c0_12], %13 {strides = array<i32>} : memref<16x128xf32, #tpu.memory_space<vmem>>, vector<16x128xf32>,
    } else {
    }
    %c0 = arith.constant 0 : index
    %c0_1 = arith.constant 0 : index
    %3 = vector.load %arg7[%c0, %c0_1] : memref<16x128xf32, #tpu.memory_space<vmem>>, vector<16x128xf32>
    %c0_2 = arith.constant 0 : index
    %c0_3 = arith.constant 0 : index
    %4 = vector.load %arg3[%c0_2, %c0_3] : memref<16x32xf32, #tpu.memory_space<vmem>>, vector<16x32xf32>
    %5 = arith.truncf %4 : vector<16x32xf32> to vector<16x32xbf16>
    %c0_4 = arith.constant 0 : index
    %c0_5 = arith.constant 0 : index
    %6 = vector.load %arg4[%c0_4, %c0_5] : memref<32x128xbf16, #tpu.memory_space<vmem>>, vector<32x128xbf16>
    %cst = arith.constant dense<0.000000e+00> : vector<16x128xf32>
    %7 = tpu.matmul %5, %6, %cst {dimension_numbers = #tpu.dot_dimension_numbers<[1], [0], [0], [1], [0, 0, 1, 1], [], []>} : vector<16x32xbf16>, vector<32x128xbf16>, vector<16x128xf32> -> vector<16x128xf32>
    %8 = arith.addf %3, %7 : vector<16x128xf32>
    %c0_6 = arith.constant 0 : index
    %c0_7 = arith.constant 0 : index
    %9 = vector.load %arg7[%c0_6, %c0_7] : memref<16x128xf32, #tpu.memory_space<vmem>>, vector<16x128xf32>
    tpu.vector_store %arg7[%c0_6, %c0_7], %8 {strides = array<i32>} : memref<16x128xf32, #tpu.memory_space<vmem>>, vector<16x128xf32>,
    %c0_i32_8 = arith.constant 0 : i32
    %10 = arith.cmpi eq, %arg2, %c0_i32_8 : i32
    %11 = arith.extui %10 : i1 to i32
    %c0_i32_9 = arith.constant 0 : i32
    %12 = arith.cmpi ne, %11, %c0_i32_9 : i32
    scf.if %12 {
      %c0_10 = arith.constant 0 : index
      %c0_11 = arith.constant 0 : index
      %13 = vector.load %arg7[%c0_10, %c0_11] : memref<16x128xf32, #tpu.memory_space<vmem>>, vector<16x128xf32>
      %c0_12 = arith.constant 0 : index
      %c0_13 = arith.constant 0 : index
      %14 = vector.load %arg5[%c0_12, %c0_13] : memref<1x128xf32, #tpu.memory_space<vmem>>, vector<1x128xf32>
      %15 = vector.broadcast %14 : vector<1x128xf32> to vector<16x128xf32>
      %16 = arith.addf %13, %15 : vector<16x128xf32>
      %cst_14 = arith.constant 0.000000e+00 : f32
      %17 = vector.broadcast %cst_14 : f32 to vector<16x128xf32>
      %18 = arith.maximumf %16, %17 : vector<16x128xf32>
      %19 = arith.truncf %18 : vector<16x128xf32> to vector<16x128xbf16>
      %c0_15 = arith.constant 0 : index
      %c0_16 = arith.constant 0 : index
      %20 = vector.load %arg6[%c0_15, %c0_16] : memref<16x128xbf16, #tpu.memory_space<vmem>>, vector<16x128xbf16>
      tpu.vector_store %arg6[%c0_15, %c0_16], %19 {strides = array<i32>} : memref<16x128xbf16, #tpu.memory_space<vmem>>, vector<16x128xbf16>,
    } else {
    }
    return
  }
  func.func @transform_0(%arg0: i32, %arg1: i32, %arg2: i32) -> (i32, i32) {
    %c0_i32 = arith.constant 0 : i32
    return %arg0, %arg2 : i32, i32
  }
  func.func @transform_1(%arg0: i32, %arg1: i32, %arg2: i32) -> (i32, i32) {
    %c0_i32 = arith.constant 0 : i32
    return %arg2, %arg1 : i32, i32
  }
  func.func @transform_2(%arg0: i32, %arg1: i32, %arg2: i32) -> (i32, i32) {
    %c0_i32 = arith.constant 0 : i32
    %c0_i32_0 = arith.constant 0 : i32
    return %c0_i32, %arg1 : i32, i32
  }
  func.func @transform_3(%arg0: i32, %arg1: i32, %arg2: i32) -> (i32, i32) {
    %c0_i32 = arith.constant 0 : i32
    return %arg0, %arg1 : i32, i32
  }
}

module attributes {stable_mosaic.version = 11 : i64} {
  func.func @_linear_res_noise_kernel(%arg0: i32, %arg1: i32, %arg2: i32, %arg3: memref<16x128xbf16, #tpu.memory_space<vmem>>, %arg4: memref<128x32xbf16, #tpu.memory_space<vmem>>, %arg5: memref<1x32xf32, #tpu.memory_space<vmem>>, %arg6: memref<16x32xf32, #tpu.memory_space<vmem>>, %arg7: memref<16x32xf32, #tpu.memory_space<vmem>>, %arg8: memref<16x32xf32, #tpu.memory_space<vmem>>, %arg9: memref<16x32xf32, #tpu.memory_space<vmem>>) attributes {dimension_semantics = [#tpu.dimension_semantics<parallel>, #tpu.dimension_semantics<parallel>, #tpu.dimension_semantics<arbitrary>], iteration_bounds = array<i64: 1, 1, 1>, scalar_prefetch = 0 : i64, scratch_operands = 1 : i64, tpu.core_type = #tpu.core_type<tc>, window_params = [{transform_indices = @transform_0, window_bounds = array<i64: 16, 128>}, {transform_indices = @transform_1, window_bounds = array<i64: 128, 32>}, {transform_indices = @transform_2, window_bounds = array<i64: 1, 32>}, {transform_indices = @transform_3, window_bounds = array<i64: 16, 32>}, {transform_indices = @transform_4, window_bounds = array<i64: 16, 32>}, {transform_indices = @transform_5, window_bounds = array<i64: 16, 32>}]} {
    %c0_i32 = arith.constant 0 : i32
    %0 = arith.cmpi eq, %arg2, %c0_i32 : i32
    %1 = arith.extui %0 : i1 to i32
    %c0_i32_0 = arith.constant 0 : i32
    %2 = arith.cmpi ne, %1, %c0_i32_0 : i32
    scf.if %2 {
      %cst_10 = arith.constant 0.000000e+00 : f32
      %12 = vector.broadcast %cst_10 : f32 to vector<16x32xf32>
      %c0_11 = arith.constant 0 : index
      %c0_12 = arith.constant 0 : index
      %13 = vector.load %arg9[%c0_11, %c0_12] : memref<16x32xf32, #tpu.memory_space<vmem>>, vector<16x32xf32>
      tpu.vector_store %arg9[%c0_11, %c0_12], %12 {strides = array<i32>} : memref<16x32xf32, #tpu.memory_space<vmem>>, vector<16x32xf32>,
    } else {
    }
    %c0 = arith.constant 0 : index
    %c0_1 = arith.constant 0 : index
    %3 = vector.load %arg9[%c0, %c0_1] : memref<16x32xf32, #tpu.memory_space<vmem>>, vector<16x32xf32>
    %c0_2 = arith.constant 0 : index
    %c0_3 = arith.constant 0 : index
    %4 = vector.load %arg3[%c0_2, %c0_3] : memref<16x128xbf16, #tpu.memory_space<vmem>>, vector<16x128xbf16>
    %c0_4 = arith.constant 0 : index
    %c0_5 = arith.constant 0 : index
    %5 = vector.load %arg4[%c0_4, %c0_5] : memref<128x32xbf16, #tpu.memory_space<vmem>>, vector<128x32xbf16>
    %cst = arith.constant dense<0.000000e+00> : vector<16x32xf32>
    %6 = tpu.matmul %4, %5, %cst {dimension_numbers = #tpu.dot_dimension_numbers<[1], [0], [0], [1], [0, 0, 1, 1], [], []>} : vector<16x128xbf16>, vector<128x32xbf16>, vector<16x32xf32> -> vector<16x32xf32>
    %7 = arith.addf %3, %6 : vector<16x32xf32>
    %c0_6 = arith.constant 0 : index
    %c0_7 = arith.constant 0 : index
    %8 = vector.load %arg9[%c0_6, %c0_7] : memref<16x32xf32, #tpu.memory_space<vmem>>, vector<16x32xf32>
    tpu.vector_store %arg9[%c0_6, %c0_7], %7 {strides = array<i32>} : memref<16x32xf32, #tpu.memory_space<vmem>>, vector<16x32xf32>,
    %c0_i32_8 = arith.constant 0 : i32
    %9 = arith.cmpi eq, %arg2, %c0_i32_8 : i32
    %10 = arith.extui %9 : i1 to i32
    %c0_i32_9 = arith.constant 0 : i32
    %11 = arith.cmpi ne, %10, %c0_i32_9 : i32
    scf.if %11 {
      %c0_10 = arith.constant 0 : index
      %c0_11 = arith.constant 0 : index
      %12 = vector.load %arg9[%c0_10, %c0_11] : memref<16x32xf32, #tpu.memory_space<vmem>>, vector<16x32xf32>
      %c0_12 = arith.constant 0 : index
      %c0_13 = arith.constant 0 : index
      %13 = vector.load %arg5[%c0_12, %c0_13] : memref<1x32xf32, #tpu.memory_space<vmem>>, vector<1x32xf32>
      %14 = vector.broadcast %13 : vector<1x32xf32> to vector<16x32xf32>
      %15 = arith.addf %12, %14 : vector<16x32xf32>
      %c0_14 = arith.constant 0 : index
      %c0_15 = arith.constant 0 : index
      %16 = vector.load %arg6[%c0_14, %c0_15] : memref<16x32xf32, #tpu.memory_space<vmem>>, vector<16x32xf32>
      %17 = arith.addf %15, %16 : vector<16x32xf32>
      %c0_16 = arith.constant 0 : index
      %c0_17 = arith.constant 0 : index
      %18 = vector.load %arg7[%c0_16, %c0_17] : memref<16x32xf32, #tpu.memory_space<vmem>>, vector<16x32xf32>
      %19 = arith.addf %17, %18 : vector<16x32xf32>
      %c0_18 = arith.constant 0 : index
      %c0_19 = arith.constant 0 : index
      %20 = vector.load %arg8[%c0_18, %c0_19] : memref<16x32xf32, #tpu.memory_space<vmem>>, vector<16x32xf32>
      tpu.vector_store %arg8[%c0_18, %c0_19], %19 {strides = array<i32>} : memref<16x32xf32, #tpu.memory_space<vmem>>, vector<16x32xf32>,
    } else {
    }
    return
  }
  func.func @transform_0(%arg0: i32, %arg1: i32, %arg2: i32) -> (i32, i32) {
    %c0_i32 = arith.constant 0 : i32
    return %arg0, %arg2 : i32, i32
  }
  func.func @transform_1(%arg0: i32, %arg1: i32, %arg2: i32) -> (i32, i32) {
    %c0_i32 = arith.constant 0 : i32
    return %arg2, %arg1 : i32, i32
  }
  func.func @transform_2(%arg0: i32, %arg1: i32, %arg2: i32) -> (i32, i32) {
    %c0_i32 = arith.constant 0 : i32
    %c0_i32_0 = arith.constant 0 : i32
    return %c0_i32, %arg1 : i32, i32
  }
  func.func @transform_3(%arg0: i32, %arg1: i32, %arg2: i32) -> (i32, i32) {
    %c0_i32 = arith.constant 0 : i32
    return %arg0, %arg1 : i32, i32
  }
  func.func @transform_4(%arg0: i32, %arg1: i32, %arg2: i32) -> (i32, i32) {
    %c0_i32 = arith.constant 0 : i32
    return %arg0, %arg1 : i32, i32
  }
  func.func @transform_5(%arg0: i32, %arg1: i32, %arg2: i32) -> (i32, i32) {
    %c0_i32 = arith.constant 0 : i32
    return %arg0, %arg1 : i32, i32
  }
}

module attributes {stable_mosaic.version = 11 : i64} {
  func.func @_linear_res_noise_kernel(%arg0: i32, %arg1: i32, %arg2: i32, %arg3: memref<16x128xbf16, #tpu.memory_space<vmem>>, %arg4: memref<128x32xbf16, #tpu.memory_space<vmem>>, %arg5: memref<1x32xf32, #tpu.memory_space<vmem>>, %arg6: memref<16x32xf32, #tpu.memory_space<vmem>>, %arg7: memref<16x32xf32, #tpu.memory_space<vmem>>, %arg8: memref<16x32xf32, #tpu.memory_space<vmem>>, %arg9: memref<16x32xf32, #tpu.memory_space<vmem>>) attributes {dimension_semantics = [#tpu.dimension_semantics<parallel>, #tpu.dimension_semantics<parallel>, #tpu.dimension_semantics<arbitrary>], iteration_bounds = array<i64: 1, 1, 1>, scalar_prefetch = 0 : i64, scratch_operands = 1 : i64, tpu.core_type = #tpu.core_type<tc>, window_params = [{transform_indices = @transform_0, window_bounds = array<i64: 16, 128>}, {transform_indices = @transform_1, window_bounds = array<i64: 128, 32>}, {transform_indices = @transform_2, window_bounds = array<i64: 1, 32>}, {transform_indices = @transform_3, window_bounds = array<i64: 16, 32>}, {transform_indices = @transform_4, window_bounds = array<i64: 16, 32>}, {transform_indices = @transform_5, window_bounds = array<i64: 16, 32>}]} {
    %c0_i32 = arith.constant 0 : i32
    %0 = arith.cmpi eq, %arg2, %c0_i32 : i32
    %1 = arith.extui %0 : i1 to i32
    %c0_i32_0 = arith.constant 0 : i32
    %2 = arith.cmpi ne, %1, %c0_i32_0 : i32
    scf.if %2 {
      %cst_10 = arith.constant 0.000000e+00 : f32
      %12 = vector.broadcast %cst_10 : f32 to vector<16x32xf32>
      %c0_11 = arith.constant 0 : index
      %c0_12 = arith.constant 0 : index
      %13 = vector.load %arg9[%c0_11, %c0_12] : memref<16x32xf32, #tpu.memory_space<vmem>>, vector<16x32xf32>
      tpu.vector_store %arg9[%c0_11, %c0_12], %12 {strides = array<i32>} : memref<16x32xf32, #tpu.memory_space<vmem>>, vector<16x32xf32>,
    } else {
    }
    %c0 = arith.constant 0 : index
    %c0_1 = arith.constant 0 : index
    %3 = vector.load %arg9[%c0, %c0_1] : memref<16x32xf32, #tpu.memory_space<vmem>>, vector<16x32xf32>
    %c0_2 = arith.constant 0 : index
    %c0_3 = arith.constant 0 : index
    %4 = vector.load %arg3[%c0_2, %c0_3] : memref<16x128xbf16, #tpu.memory_space<vmem>>, vector<16x128xbf16>
    %c0_4 = arith.constant 0 : index
    %c0_5 = arith.constant 0 : index
    %5 = vector.load %arg4[%c0_4, %c0_5] : memref<128x32xbf16, #tpu.memory_space<vmem>>, vector<128x32xbf16>
    %cst = arith.constant dense<0.000000e+00> : vector<16x32xf32>
    %6 = tpu.matmul %4, %5, %cst {dimension_numbers = #tpu.dot_dimension_numbers<[1], [0], [0], [1], [0, 0, 1, 1], [], []>} : vector<16x128xbf16>, vector<128x32xbf16>, vector<16x32xf32> -> vector<16x32xf32>
    %7 = arith.addf %3, %6 : vector<16x32xf32>
    %c0_6 = arith.constant 0 : index
    %c0_7 = arith.constant 0 : index
    %8 = vector.load %arg9[%c0_6, %c0_7] : memref<16x32xf32, #tpu.memory_space<vmem>>, vector<16x32xf32>
    tpu.vector_store %arg9[%c0_6, %c0_7], %7 {strides = array<i32>} : memref<16x32xf32, #tpu.memory_space<vmem>>, vector<16x32xf32>,
    %c0_i32_8 = arith.constant 0 : i32
    %9 = arith.cmpi eq, %arg2, %c0_i32_8 : i32
    %10 = arith.extui %9 : i1 to i32
    %c0_i32_9 = arith.constant 0 : i32
    %11 = arith.cmpi ne, %10, %c0_i32_9 : i32
    scf.if %11 {
      %c0_10 = arith.constant 0 : index
      %c0_11 = arith.constant 0 : index
      %12 = vector.load %arg9[%c0_10, %c0_11] : memref<16x32xf32, #tpu.memory_space<vmem>>, vector<16x32xf32>
      %c0_12 = arith.constant 0 : index
      %c0_13 = arith.constant 0 : index
      %13 = vector.load %arg5[%c0_12, %c0_13] : memref<1x32xf32, #tpu.memory_space<vmem>>, vector<1x32xf32>
      %14 = vector.broadcast %13 : vector<1x32xf32> to vector<16x32xf32>
      %15 = arith.addf %12, %14 : vector<16x32xf32>
      %c0_14 = arith.constant 0 : index
      %c0_15 = arith.constant 0 : index
      %16 = vector.load %arg6[%c0_14, %c0_15] : memref<16x32xf32, #tpu.memory_space<vmem>>, vector<16x32xf32>
      %17 = arith.addf %15, %16 : vector<16x32xf32>
      %c0_16 = arith.constant 0 : index
      %c0_17 = arith.constant 0 : index
      %18 = vector.load %arg7[%c0_16, %c0_17] : memref<16x32xf32, #tpu.memory_space<vmem>>, vector<16x32xf32>
      %19 = arith.addf %17, %18 : vector<16x32xf32>
      %c0_18 = arith.constant 0 : index
      %c0_19 = arith.constant 0 : index
      %20 = vector.load %arg8[%c0_18, %c0_19] : memref<16x32xf32, #tpu.memory_space<vmem>>, vector<16x32xf32>
      tpu.vector_store %arg8[%c0_18, %c0_19], %19 {strides = array<i32>} : memref<16x32xf32, #tpu.memory_space<vmem>>, vector<16x32xf32>,
    } else {
    }
    return
  }
  func.func @transform_0(%arg0: i32, %arg1: i32, %arg2: i32) -> (i32, i32) {
    %c0_i32 = arith.constant 0 : i32
    return %arg0, %arg2 : i32, i32
  }
  func.func @transform_1(%arg0: i32, %arg1: i32, %arg2: i32) -> (i32, i32) {
    %c0_i32 = arith.constant 0 : i32
    return %arg2, %arg1 : i32, i32
  }
  func.func @transform_2(%arg0: i32, %arg1: i32, %arg2: i32) -> (i32, i32) {
    %c0_i32 = arith.constant 0 : i32
    %c0_i32_0 = arith.constant 0 : i32
    return %c0_i32, %arg1 : i32, i32
  }
  func.func @transform_3(%arg0: i32, %arg1: i32, %arg2: i32) -> (i32, i32) {
    %c0_i32 = arith.constant 0 : i32
    return %arg0, %arg1 : i32, i32
  }
  func.func @transform_4(%arg0: i32, %arg1: i32, %arg2: i32) -> (i32, i32) {
    %c0_i32 = arith.constant 0 : i32
    return %arg0, %arg1 : i32, i32
  }
  func.func @transform_5(%arg0: i32, %arg1: i32, %arg2: i32) -> (i32, i32) {
    %c0_i32 = arith.constant 0 : i32
    return %arg0, %arg1 : i32, i32
  }
}

</mosaic_0001>

<llo_original>
// kernel: encoder_forward.10
$region0: #{encoder_forward.10}
  #allocation0 [shape = 'u32[]', space=smem, size = 0x4, offset = 0x4, fixed_abs, tag = 'smem constant byte address 0x4 - core index']
  #allocation1 [shape = 'u32[72,128]{1,0:T(1,128)}', space=vmem, size = 0x9000, scoped, tag = 'internal scratch']
  #allocation2 [shape = 'f32[16,96]{1,0:T(8,128)}', space=vmem, size = 0x2000, scoped, tag = 'scratch operand']
  %s0 = inlined_call_operand.vmem [shape: f32[16,32], index: 0, kind: input, shape index: {}]
  %s1 = inlined_call_operand.vmem [shape: bf16[32,96], index: 1, kind: input, shape index: {}]
  %s2 = inlined_call_operand.vmem [shape: f32[1,96], index: 2, kind: input, shape index: {}]
  %s3 = inlined_call_operand.vmem [shape: bf16[16,96], index: 3, kind: output, shape index: {}]
  %s4 = sld [smem:[#allocation0]]
  $region30: #{encoder_forward.10} parent=0
    _
  %s6 = ssub.s32 1, %s4
  %s7 = scalar_select 0, %s6, %s4
  // Predicated region
  $region2: #{encoder_forward.10} parent=0 // pred_check
    _
  $region3: #{encoder_forward.10} parent=0 // pred_check_branch
    %9 = sbr.rel (0) target = $region5
  $region4: #{encoder_forward.10} parent=0 // pred_region
    _
  $region5: #{encoder_forward.10} parent=0 // pred_fallthru
    _
  // Predicated region
  $region6: #{encoder_forward.10} parent=0 // pred_check
    _
  $region7: #{encoder_forward.10} parent=0 // pred_check_branch
    %11 = sbr.rel (0) target = $region9
  $region8: #{encoder_forward.10} parent=0 // pred_region
    _
  $region9: #{encoder_forward.10} parent=0 // pred_fallthru
    _
  // Predicated region
  $region10: #{encoder_forward.10} parent=0 // pred_check
    _
  $region11: #{encoder_forward.10} parent=0 // pred_check_branch
    %13 = sbr.rel (0) target = $region13
  $region12: #{encoder_forward.10} parent=0 // pred_region
    _
  $region13: #{encoder_forward.10} parent=0 // pred_fallthru
    _
  %p15 = scmp.eq.s32.totalorder 0, 0
  // Predicated region
  $region14: #{encoder_forward.10} parent=0 // pred_check
    %p16 = pneg %p15
  $region15: #{encoder_forward.10} parent=0 // pred_check_branch
    %18 = sbr.rel (%p16) target = $region17
  $region16: #{encoder_forward.10} parent=0 // pred_region
    %vm19 = vcmask 785408
    %20 = vst.msk [vmem:[#allocation2] sm:$0xff] %vm19, 0.0
    %21 = vst.msk [vmem:[#allocation2 + $0x8] sm:$0xff] %vm19, 0.0
  $region17: #{encoder_forward.10} parent=0 // pred_fallthru
    _
  %v22 = vld [vmem:[#allocation2] sm:$0xff]
  %v23 = vld [vmem:[#allocation2 + $0x8] sm:$0xff]
  %v24 = vld [vmem:[%s0] sm:$0xff]
  %v25 = vld [vmem:[%s0 + $0x8] sm:$0xff]
  %v26 = vpack.c.bf16 %v25, %v24
  %v27 = vld [vmem:[%s1] sm:$0xf]
  %v28 = vld [vmem:[%s1 + $0x4] sm:$0xf]
  %v29 = vld [vmem:[%s1 + $0x8] sm:$0xf]
  %v30 = vld [vmem:[%s1 + $0xc] sm:$0xf]
  %v35 = vunpack.c.l.b16 %v27
  %v36 = vunpack.c.l.b16 %v28
  %v37 = vunpack.c.l.b16 %v29
  %v38 = vunpack.c.l.b16 %v30
  %v39 = vpack.c.b16 %v36, %v35
  %v40 = vpack.c.b16 %v38, %v37
  %vm43 = vcmask 261120
  %v45 = vsel %vm43, %v26, 0
  %47 = vmatpush.bf16.msra.mxu0 0
  %48 = vmatpush.bf16.msra.mxu0 0
  %49 = vmatpush.bf16.msra.mxu0 0
  %50 = vmatpush.bf16.msra.mxu0 0
  %51 = vmatpush.bf16.msra.mxu0 0
  %52 = vmatpush.bf16.msra.mxu0 0
  %53 = vmatpush.bf16.msra.mxu0 %v40
  %54 = vmatpush.bf16.msra.mxu0 %v39
  %55 = vmatmul.bf16.gmra.mxu0 %v45
  %v56 = vpop.f32.mrf.mxu0
  %v57 = vadd.f32 0.0, %v56
  %v58 = vpop.f32.mrf.mxu0
  %v59 = vadd.f32 0.0, %v58
  %60 = vdwg.mxu0
  %v61 = vadd.f32 %v22, %v57
  %v62 = vadd.f32 %v23, %v59
  %vm63 = vcmask 785408
  %64 = vst.msk [vmem:[#allocation2] sm:$0xff] %vm63, %v61
  %65 = vst.msk [vmem:[#allocation2 + $0x8] sm:$0xff] %vm63, %v62
  // Predicated region
  $region18: #{encoder_forward.10} parent=0 // pred_check
    %p66 = pneg %p15
  $region19: #{encoder_forward.10} parent=0 // pred_check_branch
    %68 = sbr.rel (%p66) target = $region21
  $region20: #{encoder_forward.10} parent=0 // pred_region
    %v69 = vld [vmem:[#allocation2] sm:$0xff]
    %v70 = vld [vmem:[#allocation2 + $0x8] sm:$0xff]
    %v71 = vld [vmem:[%s2] sm:$0x1]
    %v73 = vperm.slane %v71, 0
    %v75 = vadd.f32 %v69, %v73
    %v76 = vadd.f32 %v70, %v73
    %v77 = vmax.f32 %v75, 0.0
    %v78 = vmax.f32 %v76, 0.0
    %v79 = vpack.c.bf16 %v77, %v77
    %v80 = vpack.c.bf16 %v78, %v78
    %vm81 = vcmask 781312
    %82 = vst.msk [vmem:[%s3] sm:$0xf] %vm81, %v79
    %83 = vst.msk [vmem:[%s3 + $0x4] sm:$0xf] %vm81, %v80
  $region21: #{encoder_forward.10} parent=0 // pred_fallthru
    _
  // Predicated region
  $region22: #{encoder_forward.10} parent=0 // pred_check
    _
  $region23: #{encoder_forward.10} parent=0 // pred_check_branch
    %85 = sbr.rel (0) target = $region25
  $region24: #{encoder_forward.10} parent=0 // pred_region
    _
  $region25: #{encoder_forward.10} parent=0 // pred_fallthru
    _
  // Predicated region
  $region26: #{encoder_forward.10} parent=0 // pred_check
    _
  $region27: #{encoder_forward.10} parent=0 // pred_check_branch
    %87 = sbr.rel (0) target = $region29
  $region28: #{encoder_forward.10} parent=0 // pred_region
    _
  $region29: #{encoder_forward.10} parent=0 // pred_fallthru
    _

// kernel: encoder_forward.14
$region0: #{encoder_forward.14}
  #allocation0 [shape = 'u32[]', space=smem, size = 0x4, offset = 0x4, fixed_abs, tag = 'smem constant byte address 0x4 - core index']
  #allocation1 [shape = 'u32[72,128]{1,0:T(1,128)}', space=vmem, size = 0x9000, scoped, tag = 'internal scratch']
  %s0 = inlined_call_operand.vmem [shape: bf16[16,32], index: 0, kind: input, shape index: {}]
  %s1 = inlined_call_operand.vmem [shape: f32[16,32], index: 1, kind: input, shape index: {}]
  %s2 = inlined_call_operand.vmem [shape: f32[1,32], index: 2, kind: input, shape index: {}]
  %s3 = inlined_call_operand.vmem [shape: f32[1,32], index: 3, kind: input, shape index: {}]
  %s4 = inlined_call_operand.vmem [shape: f32[16,32], index: 4, kind: output, shape index: {}]
  %s5 = sld [smem:[#allocation0]]
  $region26: #{encoder_forward.14} parent=0
    _
  %s7 = ssub.s32 1, %s5
  %s8 = scalar_select 0, %s7, %s5
  // Predicated region
  $region2: #{encoder_forward.14} parent=0 // pred_check
    _
  $region3: #{encoder_forward.14} parent=0 // pred_check_branch
    %10 = sbr.rel (0) target = $region5
  $region4: #{encoder_forward.14} parent=0 // pred_region
    _
  $region5: #{encoder_forward.14} parent=0 // pred_fallthru
    _
  // Predicated region
  $region6: #{encoder_forward.14} parent=0 // pred_check
    _
  $region7: #{encoder_forward.14} parent=0 // pred_check_branch
    %12 = sbr.rel (0) target = $region9
  $region8: #{encoder_forward.14} parent=0 // pred_region
    _
  $region9: #{encoder_forward.14} parent=0 // pred_fallthru
    _
  // Predicated region
  $region10: #{encoder_forward.14} parent=0 // pred_check
    _
  $region11: #{encoder_forward.14} parent=0 // pred_check_branch
    %14 = sbr.rel (0) target = $region13
  $region12: #{encoder_forward.14} parent=0 // pred_region
    _
  $region13: #{encoder_forward.14} parent=0 // pred_fallthru
    _
  // Predicated region
  $region14: #{encoder_forward.14} parent=0 // pred_check
    _
  $region15: #{encoder_forward.14} parent=0 // pred_check_branch
    %16 = sbr.rel (0) target = $region17
  $region16: #{encoder_forward.14} parent=0 // pred_region
    _
  $region17: #{encoder_forward.14} parent=0 // pred_fallthru
    _
  %v17 = vld [vmem:[%s0] sm:$0xf]
  %v18 = vld [vmem:[%s0 + $0x4] sm:$0xf]
  %v19 = vunpack.c.l.bf16 %v17
  %v20 = vunpack.c.l.bf16 %v18
  %v21 = vld [vmem:[%s1] sm:$0xff]
  %v22 = vld [vmem:[%s1 + $0x8] sm:$0xff]
  %v23 = vadd.f32 %v19, %v21
  %v24 = vadd.f32 %v20, %v22
  %vm25 = vcmask 261120
  %v26 = vsel %vm25, %v23, 0.0
  %27 = vadd.xlane.f32.xlu0 %v26
  %v28 = vpop.xlane.xlu0 %27
  %v29 = vsel %vm25, %v24, 0.0
  %30 = vadd.xlane.f32.xlu0 %v29
  %v31 = vpop.xlane.xlu0 %30
  %v32 = vrcp.pop 32.0
  %v33 = vmul.f32 32.0, %v32
  %v34 = vsub.f32 1.0, %v33
  %v35 = vmul.f32 %v32, %v34
  %v36 = vadd.f32 %v32, %v35
  %vm37 = vweird.f32 %v32
  %v38 = vsel %vm37, %v32, %v36
  %v39 = vmul.f32 %v28, %v38
  %v40 = vmul.f32 %v31, %v38
  %v41 = vsub.f32 %v23, %v39
  %v42 = vsub.f32 %v24, %v40
  %v43 = vmul.f32 %v41, %v41
  %v44 = vmul.f32 %v42, %v42
  %v45 = vsel %vm25, %v43, 0.0
  %46 = vadd.xlane.f32.xlu0 %v45
  %v47 = vpop.xlane.xlu0 %46
  %v48 = vsel %vm25, %v44, 0.0
  %49 = vadd.xlane.f32.xlu0 %v48
  %v50 = vpop.xlane.xlu0 %49
  %v51 = vmul.f32 %v47, %v38
  %v52 = vmul.f32 %v50, %v38
  %v53 = vadd.f32 %v51, 1e-05
  %v54 = vadd.f32 %v52, 1e-05
  %v55 = vrsqrt.pop %v53
  %v56 = vmul.f32 %v55, %v53
  %v57 = vmul.f32 %v56, %v55
  %v58 = vmul.f32 0.5, %v57
  %v59 = vsub.f32 1.5, %v58
  %v60 = vmul.f32 %v55, %v59
  %vm61 = vweird.f32 %v53
  %vm62 = vweird.f32 %v55
  %vm63 = vmor %vm61, %vm62
  %v64 = vsel %vm63, %v55, %v60
  %v65 = vrsqrt.pop %v54
  %v66 = vmul.f32 %v65, %v54
  %v67 = vmul.f32 %v66, %v65
  %v68 = vmul.f32 0.5, %v67
  %v69 = vsub.f32 1.5, %v68
  %v70 = vmul.f32 %v65, %v69
  %vm71 = vweird.f32 %v54
  %vm72 = vweird.f32 %v65
  %vm73 = vmor %vm71, %vm72
  %v74 = vsel %vm73, %v65, %v70
  %v75 = vmul.f32 %v41, %v64
  %v76 = vmul.f32 %v42, %v74
  %v77 = vld [vmem:[%s2] sm:$0x1]
  %v79 = vperm.slane %v77, 0
  %v81 = vmul.f32 %v75, %v79
  %v82 = vmul.f32 %v76, %v79
  %v83 = vld [vmem:[%s3] sm:$0x1]
  %v85 = vperm.slane %v83, 0
  %v87 = vadd.f32 %v81, %v85
  %v88 = vadd.f32 %v82, %v85
  %89 = vst.msk [vmem:[%s4] sm:$0xff] %vm25, %v87
  %90 = vst.msk [vmem:[%s4 + $0x8] sm:$0xff] %vm25, %v88
  // Predicated region
  $region18: #{encoder_forward.14} parent=0 // pred_check
    _
  $region19: #{encoder_forward.14} parent=0 // pred_check_branch
    %92 = sbr.rel (0) target = $region21
  $region20: #{encoder_forward.14} parent=0 // pred_region
    _
  $region21: #{encoder_forward.14} parent=0 // pred_fallthru
    _
  // Predicated region
  $region22: #{encoder_forward.14} parent=0 // pred_check
    _
  $region23: #{encoder_forward.14} parent=0 // pred_check_branch
    %94 = sbr.rel (0) target = $region25
  $region24: #{encoder_forward.14} parent=0 // pred_region
    _
  $region25: #{encoder_forward.14} parent=0 // pred_fallthru
    _

// kernel: encoder_forward.11
$region0: #{encoder_forward.11}
  #allocation0 [shape = 'u32[]', space=smem, size = 0x4, offset = 0x4, fixed_abs, tag = 'smem constant byte address 0x4 - core index']
  #allocation1 [shape = 'u32[72,128]{1,0:T(1,128)}', space=vmem, size = 0x9000, scoped, tag = 'internal scratch']
  #allocation2 [shape = 'f32[8,1]{1,0:T(8,128)}', space=vmem, size = 0x1000, scoped, tag = 'scratch operand']
  #allocation3 [shape = 'f32[8,1]{1,0:T(8,128)}', space=vmem, size = 0x1000, scoped, tag = 'scratch operand']
  #allocation4 [shape = 'f32[8,8]{1,0:T(8,128)}', space=vmem, size = 0x1000, scoped, tag = 'scratch operand']
  %s0 = inlined_call_operand.vmem [shape: bf16[2,4,8,8], index: 0, kind: input, shape index: {}]
  %s1 = inlined_call_operand.vmem [shape: bf16[2,4,8,8], index: 1, kind: input, shape index: {}]
  %s2 = inlined_call_operand.vmem [shape: bf16[2,4,8,8], index: 2, kind: input, shape index: {}]
  %s3 = inlined_call_operand.vmem [shape: bf16[2,4,8,8], index: 3, kind: output, shape index: {}]
  %s4 = sld [smem:[#allocation0]]
  $region53: #{encoder_forward.11} parent=0
    _
  %s6 = ssub.s32 1, %s4
  %s7 = scalar_select 0, %s6, %s4
  loop: start=0, step=1, limit=10
  $region2: #{encoder_forward.11} parent=0 // loop_pre_header
    _
  $region3: #{encoder_forward.11} parent=0 // loop_header
    %s9 = sphi 0, %s13
    %p10 = scmp.ge.s32.totalorder %s9, 10
    %s16 = sphi 0, %s42
    %s17 = sphi 0, %s38
    %s18 = sphi 0, %s34
    %s19 = sphi 0, %s30
    %s20 = sphi 0, %s16
    %s21 = sphi 0, %s17
    %s22 = sphi 0, %s18
    %s23 = sphi 0, %s19
    %s24 = sphi 0, %s20
    %s25 = sphi 0, %s21
    %s26 = sphi 0, %s22
    %s27 = sphi 0, %s23
    %s49 = sphi 0, %s51
    %s52 = sphi 0, %s49
    %s53 = sphi 0, %s52
    %s69 = sphi 0, %s53
    %s79 = sphi 0, %s81
    %s82 = sphi 0, %s79
    %s83 = sphi 0, %s82
    %s99 = sphi 0, %s83
    %s109 = sphi 0, %s111
    %s112 = sphi 0, %s109
    %s113 = sphi 0, %s112
    %s129 = sphi 0, %s113
    %s139 = sphi 0, %s141
    %s142 = sphi 0, %s139
    %s143 = sphi 0, %s142
    %s159 = sphi 0, %s143
  $region4: #{encoder_forward.11} parent=0 // loop_header_branch
    %12 = sbr.rel (%p10) target = $region8
  $region5: #{encoder_forward.11} parent=0 // loop_body
    %s14 = ssub.s32 %s9, 1
    %s15 = ssub.s32 %s9, 2
    %s28 = sadd.s32 1, %s19
    %p29 = scmp.ge.s32.totalorder %s28, 1
    %s30 = scalar_select %p29, 0, %s28
    %s31 = sadd.s32 1, %s18
    %s32 = scalar_select %p29, %s31, %s18
    %p33 = scmp.ge.s32.totalorder %s32, 1
    %s34 = scalar_select %p33, 0, %s32
    %s35 = sadd.s32 1, %s17
    %s36 = scalar_select %p33, %s35, %s17
    %p37 = scmp.ge.s32.totalorder %s36, 4
    %s38 = scalar_select %p37, 0, %s36
    %s39 = sadd.s32 1, %s16
    %s40 = scalar_select %p37, %s39, %s16
    %p41 = scmp.ge.s32.totalorder %s40, 2
    %s42 = scalar_select %p41, 0, %s40
    %s43 = ssub.s32 %s16, %s42
    %s44 = ssub.s32 %s17, %s38
    %s45 = sor.u32 %s43, %s44
    %s46 = ssub.s32 %s18, %s34
    %s47 = sor.u32 %s45, %s46
    %p48 = scmp.eq.s32.totalorder %s47, 0
    %s50 = sadd.s32 %s49, 1
    %s51 = scalar_select %p48, %s49, %s50
    %p54 = pneg %p48
    %p55 = scmp.eq.s32.totalorder %s9, 7
    %p56 = por %p54, %p55
    %p57 = scmp.ne.s32.totalorder %s49, %s52
    %p58 = scmp.eq.s32.totalorder %s9, 0
    %p59 = por %p57, %p58
    %p60 = scmp.ne.s32.totalorder %s49, %s52
    %p61 = scmp.eq.s32.totalorder %s14, 7
    %p62 = por %p60, %p61
    %p63 = scmp.ne.s32.totalorder %s52, %s53
    %p64 = scmp.eq.s32.totalorder %s14, 0
    %p65 = por %p63, %p64
    %p66 = scmp.ne.s32.totalorder %s52, %s53
    %p67 = scmp.eq.s32.totalorder %s15, 7
    %p68 = por %p66, %p67
    %p70 = scmp.ne.s32.totalorder %s53, %s69
    %p71 = scmp.eq.s32.totalorder %s15, 0
    %p72 = por %p70, %p71
    %s73 = ssub.s32 %s16, %s42
    %s74 = ssub.s32 %s17, %s38
    %s75 = sor.u32 %s73, %s74
    %s76 = ssub.s32 %s19, %s30
    %s77 = sor.u32 %s75, %s76
    %p78 = scmp.eq.s32.totalorder %s77, 0
    %s80 = sadd.s32 %s79, 1
    %s81 = scalar_select %p78, %s79, %s80
    %p84 = pneg %p78
    %p85 = scmp.eq.s32.totalorder %s9, 7
    %p86 = por %p84, %p85
    %p87 = scmp.ne.s32.totalorder %s79, %s82
    %p88 = scmp.eq.s32.totalorder %s9, 0
    %p89 = por %p87, %p88
    %p90 = scmp.ne.s32.totalorder %s79, %s82
    %p91 = scmp.eq.s32.totalorder %s14, 7
    %p92 = por %p90, %p91
    %p93 = scmp.ne.s32.totalorder %s82, %s83
    %p94 = scmp.eq.s32.totalorder %s14, 0
    %p95 = por %p93, %p94
    %p96 = scmp.ne.s32.totalorder %s82, %s83
    %p97 = scmp.eq.s32.totalorder %s15, 7
    %p98 = por %p96, %p97
    %p100 = scmp.ne.s32.totalorder %s83, %s99
    %p101 = scmp.eq.s32.totalorder %s15, 0
    %p102 = por %p100, %p101
    %s103 = ssub.s32 %s16, %s42
    %s104 = ssub.s32 %s17, %s38
    %s105 = sor.u32 %s103, %s104
    %s106 = ssub.s32 %s19, %s30
    %s107 = sor.u32 %s105, %s106
    %p108 = scmp.eq.s32.totalorder %s107, 0
    %s110 = sadd.s32 %s109, 1
    %s111 = scalar_select %p108, %s109, %s110
    %p114 = pneg %p108
    %p115 = scmp.eq.s32.totalorder %s9, 7
    %p116 = por %p114, %p115
    %p117 = scmp.ne.s32.totalorder %s109, %s112
    %p118 = scmp.eq.s32.totalorder %s9, 0
    %p119 = por %p117, %p118
    %p120 = scmp.ne.s32.totalorder %s109, %s112
    %p121 = scmp.eq.s32.totalorder %s14, 7
    %p122 = por %p120, %p121
    %p123 = scmp.ne.s32.totalorder %s112, %s113
    %p124 = scmp.eq.s32.totalorder %s14, 0
    %p125 = por %p123, %p124
    %p126 = scmp.ne.s32.totalorder %s112, %s113
    %p127 = scmp.eq.s32.totalorder %s15, 7
    %p128 = por %p126, %p127
    %p130 = scmp.ne.s32.totalorder %s113, %s129
    %p131 = scmp.eq.s32.totalorder %s15, 0
    %p132 = por %p130, %p131
    %s133 = ssub.s32 %s16, %s42
    %s134 = ssub.s32 %s17, %s38
    %s135 = sor.u32 %s133, %s134
    %s136 = ssub.s32 %s18, %s34
    %s137 = sor.u32 %s135, %s136
    %p138 = scmp.eq.s32.totalorder %s137, 0
    %s140 = sadd.s32 %s139, 1
    %s141 = scalar_select %p138, %s139, %s140
    %p144 = pneg %p138
    %p145 = scmp.eq.s32.totalorder %s9, 7
    %p146 = por %p144, %p145
    %p147 = scmp.ne.s32.totalorder %s139, %s142
    %p148 = scmp.eq.s32.totalorder %s9, 0
    %p149 = por %p147, %p148
    %p150 = scmp.ne.s32.totalorder %s139, %s142
    %p151 = scmp.eq.s32.totalorder %s14, 7
    %p152 = por %p150, %p151
    %p153 = scmp.ne.s32.totalorder %s142, %s143
    %p154 = scmp.eq.s32.totalorder %s14, 0
    %p155 = por %p153, %p154
    %p156 = scmp.ne.s32.totalorder %s142, %s143
    %p157 = scmp.eq.s32.totalorder %s15, 7
    %p158 = por %p156, %p157
    %p160 = scmp.ne.s32.totalorder %s143, %s159
    %p161 = scmp.eq.s32.totalorder %s15, 0
    %p162 = por %p160, %p161
    %p163 = scmp.le.s32.totalorder 1, %s9
    %p164 = scmp.lt.s32.totalorder %s9, 9
    %p165 = pnand %p163, %p164
    %p166 = pneg %p165
    // Predicated region
    $region9: #{encoder_forward.11} parent=5 // pred_check
      _
    $region10: #{encoder_forward.11} parent=5 // pred_check_branch
      %168 = sbr.rel (%p165) target = $region12
    $region11: #{encoder_forward.11} parent=5 // pred_region
      %s169 = ssub.s32 %s9, 1
    $region12: #{encoder_forward.11} parent=5 // pred_fallthru
      _
    %p170 = scmp.lt.s32.totalorder %s9, 8
    // Predicated region
    $region13: #{encoder_forward.11} parent=5 // pred_check
      %p171 = pneg %p170
    $region14: #{encoder_forward.11} parent=5 // pred_check_branch
      %173 = sbr.rel (%p171) target = $region16
    $region15: #{encoder_forward.11} parent=5 // pred_region
      // Predicated region
      $region17: #{encoder_forward.11} parent=15 // pred_check
        %p174 = pneg %p59
      $region18: #{encoder_forward.11} parent=15 // pred_check_branch
        %176 = sbr.rel (%p174) target = $region20
      $region19: #{encoder_forward.11} parent=15 // pred_region
        %p177 = scmp.lt.s32.totalorder %s16, 1
        %s178 = scalar_select %p177, %s16, 1
        %p179 = scmp.lt.s32.totalorder %s17, 3
        %s180 = scalar_select %p179, %s17, 3
        %p181 = scmp.lt.s32.totalorder %s18, 0
        %s182 = scalar_select %p181, %s18, 0
        %s183 = sadd.s32 %s182, %s180
        %s184 = smul.addr %s178, 4
        %s185 = sadd.s32 %s183, %s184
        %s186 = smul.addr %s185, 4
        %s187 = scalar_lea.vmem %s0, %s186
      $region20: #{encoder_forward.11} parent=15 // pred_fallthru
        _
      // Predicated region
      $region21: #{encoder_forward.11} parent=15 // pred_check
        %p188 = pneg %p89
      $region22: #{encoder_forward.11} parent=15 // pred_check_branch
        %190 = sbr.rel (%p188) target = $region24
      $region23: #{encoder_forward.11} parent=15 // pred_region
        %p191 = scmp.lt.s32.totalorder %s16, 1
        %s192 = scalar_select %p191, %s16, 1
        %p193 = scmp.lt.s32.totalorder %s17, 3
        %s194 = scalar_select %p193, %s17, 3
        %p195 = scmp.lt.s32.totalorder %s19, 0
        %s196 = scalar_select %p195, %s19, 0
        %s197 = sadd.s32 %s196, %s194
        %s198 = smul.addr %s192, 4
        %s199 = sadd.s32 %s197, %s198
        %s200 = smul.addr %s199, 4
        %s201 = scalar_lea.vmem %s1, %s200
      $region24: #{encoder_forward.11} parent=15 // pred_fallthru
        _
      // Predicated region
      $region25: #{encoder_forward.11} parent=15 // pred_check
        %p202 = pneg %p119
      $region26: #{encoder_forward.11} parent=15 // pred_check_branch
        %204 = sbr.rel (%p202) target = $region28
      $region27: #{encoder_forward.11} parent=15 // pred_region
        %p205 = scmp.lt.s32.totalorder %s16, 1
        %s206 = scalar_select %p205, %s16, 1
        %p207 = scmp.lt.s32.totalorder %s17, 3
        %s208 = scalar_select %p207, %s17, 3
        %p209 = scmp.lt.s32.totalorder %s19, 0
        %s210 = scalar_select %p209, %s19, 0
        %s211 = sadd.s32 %s210, %s208
        %s212 = smul.addr %s206, 4
        %s213 = sadd.s32 %s211, %s212
        %s214 = smul.addr %s213, 4
        %s215 = scalar_lea.vmem %s2, %s214
      $region28: #{encoder_forward.11} parent=15 // pred_fallthru
        _
    $region16: #{encoder_forward.11} parent=5 // pred_fallthru
      _
    %p216 = scmp.le.s32.totalorder 1, %s9
    %p217 = scmp.lt.s32.totalorder %s9, 9
    %p218 = pnand %p216, %p217
    %p219 = pneg %p218
    // Predicated region
    $region29: #{encoder_forward.11} parent=5 // pred_check
      _
    $region30: #{encoder_forward.11} parent=5 // pred_check_branch
      %221 = sbr.rel (%p218) target = $region32
    $region31: #{encoder_forward.11} parent=5 // pred_region
      %s222 = ssub.s32 %s9, 1
      %p223 = scmp.lt.s32.totalorder %s20, 1
      %s224 = scalar_select %p223, %s20, 1
      %p225 = scmp.lt.s32.totalorder %s21, 3
      %s226 = scalar_select %p225, %s21, 3
      %p227 = scmp.lt.s32.totalorder %s22, 0
      %s228 = scalar_select %p227, %s22, 0
      %s229 = sadd.s32 %s228, %s226
      %s230 = smul.addr %s224, 4
      %s231 = sadd.s32 %s229, %s230
      %s232 = smul.addr %s231, 4
      %s233 = scalar_lea.vmem %s0, %s232
      %p234 = pneg %p65
      %p235 = pneg %p62
      %p236 = scmp.lt.s32.totalorder %s20, 1
      %s237 = scalar_select %p236, %s20, 1
      %p238 = scmp.lt.s32.totalorder %s21, 3
      %s239 = scalar_select %p238, %s21, 3
      %p240 = scmp.lt.s32.totalorder %s23, 0
      %s241 = scalar_select %p240, %s23, 0
      %s242 = sadd.s32 %s241, %s239
      %s243 = smul.addr %s237, 4
      %s244 = sadd.s32 %s242, %s243
      %s245 = smul.addr %s244, 4
      %s246 = scalar_lea.vmem %s1, %s245
      %p247 = pneg %p95
      %p248 = pneg %p92
      %p249 = scmp.lt.s32.totalorder %s20, 1
      %s250 = scalar_select %p249, %s20, 1
      %p251 = scmp.lt.s32.totalorder %s21, 3
      %s252 = scalar_select %p251, %s21, 3
      %p253 = scmp.lt.s32.totalorder %s23, 0
      %s254 = scalar_select %p253, %s23, 0
      %s255 = sadd.s32 %s254, %s252
      %s256 = smul.addr %s250, 4
      %s257 = sadd.s32 %s255, %s256
      %s258 = smul.addr %s257, 4
      %s259 = scalar_lea.vmem %s2, %s258
      %p260 = pneg %p125
      %p261 = pneg %p122
      %p262 = pneg %p155
      %p263 = pneg %p152
      %p264 = scmp.lt.s32.totalorder %s20, 1
      %s265 = scalar_select %p264, %s20, 1
      %p266 = scmp.lt.s32.totalorder %s21, 3
      %s267 = scalar_select %p266, %s21, 3
      %p268 = scmp.lt.s32.totalorder %s22, 0
      %s269 = scalar_select %p268, %s22, 0
      %s270 = sadd.s32 %s269, %s267
      %s271 = smul.addr %s265, 4
      %s272 = sadd.s32 %s270, %s271
      %s273 = smul.addr %s272, 4
      %s274 = scalar_lea.vmem %s3, %s273
      %p275 = scmp.lt.s32.totalorder %s20, 1
      %s276 = scalar_select %p275, %s20, 1
      %p277 = scmp.lt.s32.totalorder %s21, 3
      %s278 = scalar_select %p277, %s21, 3
      %p279 = scmp.lt.s32.totalorder %s22, 0
      %s280 = scalar_select %p279, %s22, 0
      %s281 = sadd.s32 %s280, %s278
      %s282 = smul.addr %s276, 4
      %s283 = sadd.s32 %s281, %s282
      %s284 = smul.addr %s283, 4
      %s285 = scalar_lea.vmem %s0, %s284
      %p286 = scmp.lt.s32.totalorder %s20, 1
      %s287 = scalar_select %p286, %s20, 1
      %p288 = scmp.lt.s32.totalorder %s21, 3
      %s289 = scalar_select %p288, %s21, 3
      %p290 = scmp.lt.s32.totalorder %s23, 0
      %s291 = scalar_select %p290, %s23, 0
      %s292 = sadd.s32 %s291, %s289
      %s293 = smul.addr %s287, 4
      %s294 = sadd.s32 %s292, %s293
      %s295 = smul.addr %s294, 4
      %s296 = scalar_lea.vmem %s1, %s295
      %p297 = scmp.lt.s32.totalorder %s20, 1
      %s298 = scalar_select %p297, %s20, 1
      %p299 = scmp.lt.s32.totalorder %s21, 3
      %s300 = scalar_select %p299, %s21, 3
      %p301 = scmp.lt.s32.totalorder %s23, 0
      %s302 = scalar_select %p301, %s23, 0
      %s303 = sadd.s32 %s302, %s300
      %s304 = smul.addr %s298, 4
      %s305 = sadd.s32 %s303, %s304
      %s306 = smul.addr %s305, 4
      %s307 = scalar_lea.vmem %s2, %s306
      %p308 = scmp.lt.s32.totalorder %s20, 1
      %s309 = scalar_select %p308, %s20, 1
      %p310 = scmp.lt.s32.totalorder %s21, 3
      %s311 = scalar_select %p310, %s21, 3
      %p312 = scmp.lt.s32.totalorder %s22, 0
      %s313 = scalar_select %p312, %s22, 0
      %s314 = sadd.s32 %s313, %s311
      %s315 = smul.addr %s309, 4
      %s316 = sadd.s32 %s314, %s315
      %s317 = smul.addr %s316, 4
      %s318 = scalar_lea.vmem %s3, %s317
      %p320 = scmp.eq.s32.totalorder %s23, 0
      // Predicated region
      $region33: #{encoder_forward.11} parent=31 // pred_check
        %p321 = pneg %p320
      $region34: #{encoder_forward.11} parent=31 // pred_check_branch
        %323 = sbr.rel (%p321) target = $region36
      $region35: #{encoder_forward.11} parent=31 // pred_region
        %vm324 = vcmask 7168
        %325 = vst.msk [vmem:[#allocation2] sm:$0xff] %vm324, -inf
        %326 = vst.msk [vmem:[#allocation3] sm:$0xff] %vm324, 0.0
        %vm327 = vcmask 64512
        %328 = vst.msk [vmem:[#allocation4] sm:$0xff] %vm327, 0.0
      $region36: #{encoder_forward.11} parent=31 // pred_fallthru
        _
      %v329 = vld [vmem:[%s285] sm:$0xf]
      %v330 = vld [vmem:[%s296] sm:$0xf]
      %v331 = vld [vmem:[%s307] sm:$0xf]
      %vm332 = vcmask 64512
      %v334 = vsel %vm332, %v329, 0
      %v337 = vsel %vm332, %v330, 0
      %339 = vmatpush.bf16.xpose.msra.mxu0 0
      %340 = vmatpush.bf16.xpose.msra.mxu0 0
      %341 = vmatpush.bf16.xpose.msra.mxu0 0
      %342 = vmatpush.bf16.xpose.msra.mxu0 0
      %343 = vmatpush.bf16.xpose.msra.mxu0 0
      %344 = vmatpush.bf16.xpose.msra.mxu0 0
      %345 = vmatpush.bf16.xpose.msra.mxu0 0
      %346 = vmatpush.bf16.xpose.msra.mxu0 %v337
      %347 = vmatmul.bf16.gmra.mxu0 %v334
      %v348 = vpop.f32.mrf.mxu0
      %v349 = vadd.f32 0.0, %v348
      %v350 = vpop.f32.mrf.mxu0
      %351 = vdwg.mxu0
      %v352 = vld [vmem:[#allocation2] sm:$0xff]
      %v353 = vsel %vm332, %v349, -inf
      %354 = vmax.xlane.f32.xlu0 %v353
      %v355 = vpop.xlane.xlu0 %354
      %v356 = vmax.f32 %v352, %v355
      %v357 = vsub.f32 %v352, %v356
      %v358 = vmul.f32 %v357, 1.442695
      %v359 = vpow.pop %v358
      %361 = vset.pattern.permute.xlu0 0
      %362 = vperm.xlu0 %361, %v356
      %v363 = vpop.permute.xlu0 %362
      %v365 = vsub.f32 %v349, %v363
      %v366 = vmul.f32 %v365, 1.442695
      %v367 = vpow.pop %v366
      %v368 = vld [vmem:[#allocation3] sm:$0xff]
      %v369 = vmul.f32 %v359, %v368
      %v370 = vsel %vm332, %v367, 0.0
      %371 = vadd.xlane.f32.xlu0 %v370
      %v372 = vpop.xlane.xlu0 %371
      %v373 = vadd.f32 %v369, %v372
      %vm374 = vcmask 7168
      %375 = vst.msk [vmem:[#allocation3] sm:$0xff] %vm374, %v373
      %v376 = vld [vmem:[#allocation4] sm:$0xff]
      %378 = vset.pattern.permute.xlu0 0
      %379 = vperm.xlu0 %378, %v359
      %v380 = vpop.permute.xlu0 %379
      %v382 = vmul.f32 %v380, %v376
      %v383 = vpack.c.bf16 %v367, %v367
      %v385 = vsel %vm332, %v383, 0
      %vm387 = vcmask 1043456
      %v389 = vsel %vm387, %v331, 0
      %391 = vmatpush.bf16.msra.mxu0 0
      %392 = vmatpush.bf16.msra.mxu0 0
      %393 = vmatpush.bf16.msra.mxu0 0
      %394 = vmatpush.bf16.msra.mxu0 0
      %395 = vmatpush.bf16.msra.mxu0 0
      %396 = vmatpush.bf16.msra.mxu0 0
      %397 = vmatpush.bf16.msra.mxu0 0
      %398 = vmatpush.bf16.msra.mxu0 %v389
      %399 = vmatmul.bf16.gmra.mxu0 %v385
      %v400 = vpop.f32.mrf.mxu0
      %v401 = vadd.f32 0.0, %v400
      %v402 = vpop.f32.mrf.mxu0
      %403 = vdwg.mxu0
      %v404 = vadd.f32 %v382, %v401
      %405 = vst.msk [vmem:[#allocation4] sm:$0xff] %vm332, %v404
      %406 = vst.msk [vmem:[#allocation2] sm:$0xff] %vm374, %v356
      // Predicated region
      $region37: #{encoder_forward.11} parent=31 // pred_check
        %p407 = pneg %p320
      $region38: #{encoder_forward.11} parent=31 // pred_check_branch
        %409 = sbr.rel (%p407) target = $region40
      $region39: #{encoder_forward.11} parent=31 // pred_region
        %v410 = vld [vmem:[#allocation3] sm:$0xff]
        %v411 = vrcp.pop %v410
        %v412 = vld [vmem:[#allocation4] sm:$0xff]
        %414 = vset.pattern.permute.xlu0 0
        %415 = vperm.xlu0 %414, %v411
        %v416 = vpop.permute.xlu0 %415
        %v418 = vmul.f32 %v412, %v416
        %v419 = vpack.c.bf16 %v418, %v418
        %vm420 = vcmask 60416
        %421 = vst.msk [vmem:[%s318] sm:$0xf] %vm420, %v419
      $region40: #{encoder_forward.11} parent=31 // pred_fallthru
        _
      %p422 = scmp.lt.s32.totalorder %s20, 1
      %s423 = scalar_select %p422, %s20, 1
      %p424 = scmp.lt.s32.totalorder %s21, 3
      %s425 = scalar_select %p424, %s21, 3
      %p426 = scmp.lt.s32.totalorder %s22, 0
      %s427 = scalar_select %p426, %s22, 0
      %s428 = sadd.s32 %s427, %s425
      %s429 = smul.addr %s423, 4
      %s430 = sadd.s32 %s428, %s429
      %s431 = smul.addr %s430, 4
      %s432 = scalar_lea.vmem %s3, %s431
      // Predicated region
      $region41: #{encoder_forward.11} parent=31 // pred_check
        %p433 = pneg %p152
      $region42: #{encoder_forward.11} parent=31 // pred_check_branch
        %435 = sbr.rel (%p433) target = $region44
      $region43: #{encoder_forward.11} parent=31 // pred_region
        _
      $region44: #{encoder_forward.11} parent=31 // pred_fallthru
        _
    $region32: #{encoder_forward.11} parent=5 // pred_fallthru
      _
    %p436 = scmp.le.s32.totalorder 2, %s9
    // Predicated region
    $region45: #{encoder_forward.11} parent=5 // pred_check
      %p437 = pneg %p436
    $region46: #{encoder_forward.11} parent=5 // pred_check_branch
      %439 = sbr.rel (%p437) target = $region48
    $region47: #{encoder_forward.11} parent=5 // pred_region
      %s440 = ssub.s32 %s9, 2
      // Predicated region
      $region49: #{encoder_forward.11} parent=47 // pred_check
        %p441 = pneg %p158
      $region50: #{encoder_forward.11} parent=47 // pred_check_branch
        %443 = sbr.rel (%p441) target = $region52
      $region51: #{encoder_forward.11} parent=47 // pred_region
        %p444 = scmp.lt.s32.totalorder %s24, 1
        %s445 = scalar_select %p444, %s24, 1
        %p446 = scmp.lt.s32.totalorder %s25, 3
        %s447 = scalar_select %p446, %s25, 3
        %p448 = scmp.lt.s32.totalorder %s26, 0
        %s449 = scalar_select %p448, %s26, 0
        %s450 = sadd.s32 %s449, %s447
        %s451 = smul.addr %s445, 4
        %s452 = sadd.s32 %s450, %s451
        %s453 = smul.addr %s452, 4
        %s454 = scalar_lea.vmem %s3, %s453
      $region52: #{encoder_forward.11} parent=47 // pred_fallthru
        _
    $region48: #{encoder_forward.11} parent=5 // pred_fallthru
      _
  $region6: #{encoder_forward.11} parent=0 // loop_footer
    %s13 = sadd.s32 1, %s9
  $region7: #{encoder_forward.11} parent=0 // loop_footer_branch
    %8 = sbr.rel target = $region3
  $region8: #{encoder_forward.11} parent=0 // loop_exit
    _

// kernel: encoder_forward.15
$region0: #{encoder_forward.15}
  #allocation0 [shape = 'u32[]', space=smem, size = 0x4, offset = 0x4, fixed_abs, tag = 'smem constant byte address 0x4 - core index']
  #allocation1 [shape = 'u32[72,128]{1,0:T(1,128)}', space=vmem, size = 0x9000, scoped, tag = 'internal scratch']
  #allocation2 [shape = 'f32[16,128]{1,0:T(8,128)}', space=vmem, size = 0x2000, scoped, tag = 'scratch operand']
  %s0 = inlined_call_operand.vmem [shape: f32[16,32], index: 0, kind: input, shape index: {}]
  %s1 = inlined_call_operand.vmem [shape: bf16[32,128], index: 1, kind: input, shape index: {}]
  %s2 = inlined_call_operand.vmem [shape: f32[1,128], index: 2, kind: input, shape index: {}]
  %s3 = inlined_call_operand.vmem [shape: bf16[16,128], index: 3, kind: output, shape index: {}]
  %s4 = sld [smem:[#allocation0]]
  $region30: #{encoder_forward.15} parent=0
    _
  %s6 = ssub.s32 1, %s4
  %s7 = scalar_select 0, %s6, %s4
  // Predicated region
  $region2: #{encoder_forward.15} parent=0 // pred_check
    _
  $region3: #{encoder_forward.15} parent=0 // pred_check_branch
    %9 = sbr.rel (0) target = $region5
  $region4: #{encoder_forward.15} parent=0 // pred_region
    _
  $region5: #{encoder_forward.15} parent=0 // pred_fallthru
    _
  // Predicated region
  $region6: #{encoder_forward.15} parent=0 // pred_check
    _
  $region7: #{encoder_forward.15} parent=0 // pred_check_branch
    %11 = sbr.rel (0) target = $region9
  $region8: #{encoder_forward.15} parent=0 // pred_region
    _
  $region9: #{encoder_forward.15} parent=0 // pred_fallthru
    _
  // Predicated region
  $region10: #{encoder_forward.15} parent=0 // pred_check
    _
  $region11: #{encoder_forward.15} parent=0 // pred_check_branch
    %13 = sbr.rel (0) target = $region13
  $region12: #{encoder_forward.15} parent=0 // pred_region
    _
  $region13: #{encoder_forward.15} parent=0 // pred_fallthru
    _
  %p15 = scmp.eq.s32.totalorder 0, 0
  // Predicated region
  $region14: #{encoder_forward.15} parent=0 // pred_check
    %p16 = pneg %p15
  $region15: #{encoder_forward.15} parent=0 // pred_check_branch
    %18 = sbr.rel (%p16) target = $region17
  $region16: #{encoder_forward.15} parent=0 // pred_region
    %19 = vst [vmem:[#allocation2] sm:$0xff] 0.0
    %20 = vst [vmem:[#allocation2 + $0x8] sm:$0xff] 0.0
  $region17: #{encoder_forward.15} parent=0 // pred_fallthru
    _
  %v21 = vld [vmem:[#allocation2] sm:$0xff]
  %v22 = vld [vmem:[#allocation2 + $0x8] sm:$0xff]
  %v23 = vld [vmem:[%s0] sm:$0xff]
  %v24 = vld [vmem:[%s0 + $0x8] sm:$0xff]
  %v25 = vpack.c.bf16 %v24, %v23
  %v26 = vld [vmem:[%s1] sm:$0xf]
  %v27 = vld [vmem:[%s1 + $0x4] sm:$0xf]
  %v28 = vld [vmem:[%s1 + $0x8] sm:$0xf]
  %v29 = vld [vmem:[%s1 + $0xc] sm:$0xf]
  %v34 = vunpack.c.l.b16 %v26
  %v35 = vunpack.c.l.b16 %v27
  %v36 = vunpack.c.l.b16 %v28
  %v37 = vunpack.c.l.b16 %v29
  %v38 = vpack.c.b16 %v35, %v34
  %v39 = vpack.c.b16 %v37, %v36
  %vm42 = vcmask 261120
  %v44 = vsel %vm42, %v25, 0
  %46 = vmatpush.bf16.msra.mxu0 0
  %47 = vmatpush.bf16.msra.mxu0 0
  %48 = vmatpush.bf16.msra.mxu0 0
  %49 = vmatpush.bf16.msra.mxu0 0
  %50 = vmatpush.bf16.msra.mxu0 0
  %51 = vmatpush.bf16.msra.mxu0 0
  %52 = vmatpush.bf16.msra.mxu0 %v39
  %53 = vmatpush.bf16.msra.mxu0 %v38
  %54 = vmatmul.bf16.gmra.mxu0 %v44
  %v55 = vpop.f32.mrf.mxu0
  %v56 = vadd.f32 0.0, %v55
  %v57 = vpop.f32.mrf.mxu0
  %v58 = vadd.f32 0.0, %v57
  %59 = vdwg.mxu0
  %v60 = vadd.f32 %v21, %v56
  %v61 = vadd.f32 %v22, %v58
  %62 = vst [vmem:[#allocation2] sm:$0xff] %v60
  %63 = vst [vmem:[#allocation2 + $0x8] sm:$0xff] %v61
  // Predicated region
  $region18: #{encoder_forward.15} parent=0 // pred_check
    %p64 = pneg %p15
  $region19: #{encoder_forward.15} parent=0 // pred_check_branch
    %66 = sbr.rel (%p64) target = $region21
  $region20: #{encoder_forward.15} parent=0 // pred_region
    %v67 = vld [vmem:[#allocation2] sm:$0xff]
    %v68 = vld [vmem:[#allocation2 + $0x8] sm:$0xff]
    %v69 = vld [vmem:[%s2] sm:$0x1]
    %v71 = vperm.slane %v69, 0
    %v73 = vadd.f32 %v67, %v71
    %v74 = vadd.f32 %v68, %v71
    %v75 = vmax.f32 %v73, 0.0
    %v76 = vmax.f32 %v74, 0.0
    %v77 = vpack.c.bf16 %v75, %v75
    %v78 = vpack.c.bf16 %v76, %v76
    %79 = vst [vmem:[%s3] sm:$0xf] %v77
    %80 = vst [vmem:[%s3 + $0x4] sm:$0xf] %v78
  $region21: #{encoder_forward.15} parent=0 // pred_fallthru
    _
  // Predicated region
  $region22: #{encoder_forward.15} parent=0 // pred_check
    _
  $region23: #{encoder_forward.15} parent=0 // pred_check_branch
    %82 = sbr.rel (0) target = $region25
  $region24: #{encoder_forward.15} parent=0 // pred_region
    _
  $region25: #{encoder_forward.15} parent=0 // pred_fallthru
    _
  // Predicated region
  $region26: #{encoder_forward.15} parent=0 // pred_check
    _
  $region27: #{encoder_forward.15} parent=0 // pred_check_branch
    %84 = sbr.rel (0) target = $region29
  $region28: #{encoder_forward.15} parent=0 // pred_region
    _
  $region29: #{encoder_forward.15} parent=0 // pred_fallthru
    _

// kernel: encoder_forward.21
$region0: #{encoder_forward.21}
  #allocation0 [shape = 'u32[]', space=smem, size = 0x4, offset = 0x4, fixed_abs, tag = 'smem constant byte address 0x4 - core index']
  #allocation1 [shape = 'u32[72,128]{1,0:T(1,128)}', space=vmem, size = 0x9000, scoped, tag = 'internal scratch']
  #allocation2 [shape = 'f32[16,32]{1,0:T(8,128)}', space=vmem, size = 0x2000, scoped, tag = 'scratch operand']
  %s0 = inlined_call_operand.vmem [shape: bf16[16,128], index: 0, kind: input, shape index: {}]
  %s1 = inlined_call_operand.vmem [shape: bf16[128,32], index: 1, kind: input, shape index: {}]
  %s2 = inlined_call_operand.vmem [shape: f32[1,32], index: 2, kind: input, shape index: {}]
  %s3 = inlined_call_operand.vmem [shape: f32[16,32], index: 3, kind: input, shape index: {}]
  %s4 = inlined_call_operand.vmem [shape: f32[16,32], index: 4, kind: input, shape index: {}]
  %s5 = inlined_call_operand.hbm [shape: f32[16,32], index: 5, kind: output, shape index: {}]
  %s6 = sld [smem:[#allocation0]]
  $region38: #{encoder_forward.21} parent=0
    _
  %s8 = ssub.s32 1, %s6
  %s9 = scalar_select 0, %s8, %s6
  $region1: #{encoder_forward.21} parent=0
    #allocation3 [shape = 'u8[8192]{0}', space=vmem, size = 0x2000, scoped, tag = 'output window, operand 0, single buffered']
    #allocation4 [shape = 's32[1]{0}', space=sflag, size = 0x4, scoped, tag = 'scoped memory for encoder_forward.21']
    %10 = vsyncpa [#allocation4], 0
    // Predicated region
    $region2: #{encoder_forward.21} parent=1 // pred_check
      _
    $region3: #{encoder_forward.21} parent=1 // pred_check_branch
      %12 = sbr.rel (0) target = $region5
    $region4: #{encoder_forward.21} parent=1 // pred_region
      _
    $region5: #{encoder_forward.21} parent=1 // pred_fallthru
      _
    // Predicated region
    $region6: #{encoder_forward.21} parent=1 // pred_check
      _
    $region7: #{encoder_forward.21} parent=1 // pred_check_branch
      %14 = sbr.rel (0) target = $region9
    $region8: #{encoder_forward.21} parent=1 // pred_region
      _
    $region9: #{encoder_forward.21} parent=1 // pred_fallthru
      _
    // Predicated region
    $region10: #{encoder_forward.21} parent=1 // pred_check
      _
    $region11: #{encoder_forward.21} parent=1 // pred_check_branch
      %16 = sbr.rel (0) target = $region13
    $region12: #{encoder_forward.21} parent=1 // pred_region
      _
    $region13: #{encoder_forward.21} parent=1 // pred_fallthru
      _
    // Predicated region
    $region14: #{encoder_forward.21} parent=1 // pred_check
      _
    $region15: #{encoder_forward.21} parent=1 // pred_check_branch
      %18 = sbr.rel (0) target = $region17
    $region16: #{encoder_forward.21} parent=1 // pred_region
      _
    $region17: #{encoder_forward.21} parent=1 // pred_fallthru
      _
    // Predicated region
    $region18: #{encoder_forward.21} parent=1 // pred_check
      _
    $region19: #{encoder_forward.21} parent=1 // pred_check_branch
      %20 = sbr.rel (0) target = $region21
    $region20: #{encoder_forward.21} parent=1 // pred_region
      _
    $region21: #{encoder_forward.21} parent=1 // pred_fallthru
      _
    %p21 = scmp.eq.s32.totalorder 0, 0
    // Predicated region
    $region22: #{encoder_forward.21} parent=1 // pred_check
      %p22 = pneg %p21
    $region23: #{encoder_forward.21} parent=1 // pred_check_branch
      %24 = sbr.rel (%p22) target = $region25
    $region24: #{encoder_forward.21} parent=1 // pred_region
      %vm25 = vcmask 261120
      %26 = vst.msk [vmem:[#allocation2] sm:$0xff] %vm25, 0.0
      %27 = vst.msk [vmem:[#allocation2 + $0x8] sm:$0xff] %vm25, 0.0
    $region25: #{encoder_forward.21} parent=1 // pred_fallthru
      _
    %v28 = vld [vmem:[#allocation2] sm:$0xff]
    %v29 = vld [vmem:[#allocation2 + $0x8] sm:$0xff]
    %v30 = vld [vmem:[%s0] sm:$0xf]
    %v31 = vld [vmem:[%s0 + $0x4] sm:$0xf]
    %v32 = vld [vmem:[%s1] sm:$0xf]
    %v33 = vld [vmem:[%s1 + $0x4] sm:$0xf]
    %v34 = vld [vmem:[%s1 + $0x8] sm:$0xf]
    %v35 = vld [vmem:[%s1 + $0xc] sm:$0xf]
    %v36 = vld [vmem:[%s1 + $0x10] sm:$0xf]
    %v37 = vld [vmem:[%s1 + $0x14] sm:$0xf]
    %v38 = vld [vmem:[%s1 + $0x18] sm:$0xf]
    %v39 = vld [vmem:[%s1 + $0x1c] sm:$0xf]
    %v40 = vld [vmem:[%s1 + $0x20] sm:$0xf]
    %v41 = vld [vmem:[%s1 + $0x24] sm:$0xf]
    %v42 = vld [vmem:[%s1 + $0x28] sm:$0xf]
    %v43 = vld [vmem:[%s1 + $0x2c] sm:$0xf]
    %v44 = vld [vmem:[%s1 + $0x30] sm:$0xf]
    %v45 = vld [vmem:[%s1 + $0x34] sm:$0xf]
    %v46 = vld [vmem:[%s1 + $0x38] sm:$0xf]
    %v47 = vld [vmem:[%s1 + $0x3c] sm:$0xf]
    %v50 = vunpack.c.l.b16 %v30
    %v51 = vunpack.c.l.b16 %v31
    %v52 = vpack.c.b16 %v51, %v50
    %v70 = vunpack.c.l.b16 %v32
    %v71 = vunpack.c.l.b16 %v33
    %v72 = vunpack.c.l.b16 %v34
    %v73 = vunpack.c.l.b16 %v35
    %v74 = vunpack.c.l.b16 %v36
    %v75 = vunpack.c.l.b16 %v37
    %v76 = vunpack.c.l.b16 %v38
    %v77 = vunpack.c.l.b16 %v39
    %v78 = vunpack.c.l.b16 %v40
    %v79 = vunpack.c.l.b16 %v41
    %v80 = vunpack.c.l.b16 %v42
    %v81 = vunpack.c.l.b16 %v43
    %v82 = vunpack.c.l.b16 %v44
    %v83 = vunpack.c.l.b16 %v45
    %v84 = vunpack.c.l.b16 %v46
    %v85 = vunpack.c.l.b16 %v47
    %v86 = vpack.c.b16 %v71, %v70
    %v87 = vpack.c.b16 %v73, %v72
    %v88 = vpack.c.b16 %v75, %v74
    %v89 = vpack.c.b16 %v77, %v76
    %v90 = vpack.c.b16 %v79, %v78
    %v91 = vpack.c.b16 %v81, %v80
    %v92 = vpack.c.b16 %v83, %v82
    %v93 = vpack.c.b16 %v85, %v84
    %102 = vmatpush.bf16.msra.mxu0 %v93
    %103 = vmatpush.bf16.msra.mxu0 %v92
    %104 = vmatpush.bf16.msra.mxu0 %v91
    %105 = vmatpush.bf16.msra.mxu0 %v90
    %106 = vmatpush.bf16.msra.mxu0 %v89
    %107 = vmatpush.bf16.msra.mxu0 %v88
    %108 = vmatpush.bf16.msra.mxu0 %v87
    %109 = vmatpush.bf16.msra.mxu0 %v86
    %110 = vmatmul.bf16.gmra.mxu0 %v52
    %v111 = vpop.f32.mrf.mxu0
    %v112 = vadd.f32 0.0, %v111
    %v113 = vpop.f32.mrf.mxu0
    %v114 = vadd.f32 0.0, %v113
    %115 = vdwg.mxu0
    %v116 = vadd.f32 %v28, %v112
    %v117 = vadd.f32 %v29, %v114
    %vm118 = vcmask 261120
    %119 = vst.msk [vmem:[#allocation2] sm:$0xff] %vm118, %v116
    %120 = vst.msk [vmem:[#allocation2 + $0x8] sm:$0xff] %vm118, %v117
    // Predicated region
    $region26: #{encoder_forward.21} parent=1 // pred_check
      %p121 = pneg %p21
    $region27: #{encoder_forward.21} parent=1 // pred_check_branch
      %123 = sbr.rel (%p121) target = $region29
    $region28: #{encoder_forward.21} parent=1 // pred_region
      %v124 = vld [vmem:[#allocation2] sm:$0xff]
      %v125 = vld [vmem:[#allocation2 + $0x8] sm:$0xff]
      %v126 = vld [vmem:[%s2] sm:$0x1]
      %v128 = vperm.slane %v126, 0
      %v130 = vadd.f32 %v124, %v128
      %v131 = vadd.f32 %v125, %v128
      %v132 = vld [vmem:[%s3] sm:$0xff]
      %v133 = vld [vmem:[%s3 + $0x8] sm:$0xff]
      %v134 = vadd.f32 %v130, %v132
      %v135 = vadd.f32 %v131, %v133
      %v136 = vld [vmem:[%s4] sm:$0xff]
      %v137 = vld [vmem:[%s4 + $0x8] sm:$0xff]
      %v138 = vadd.f32 %v134, %v136
      %v139 = vadd.f32 %v135, %v137
      %140 = vst.msk [vmem:[#allocation3] sm:$0xff] %vm118, %v138
      %141 = vst.msk [vmem:[#allocation3 + $0x8] sm:$0xff] %vm118, %v139
    $region29: #{encoder_forward.21} parent=1 // pred_fallthru
      _
    // Predicated region
    $region30: #{encoder_forward.21} parent=1 // pred_check
      _
    $region31: #{encoder_forward.21} parent=1 // pred_check_branch
      %143 = sbr.rel (0) target = $region33
    $region32: #{encoder_forward.21} parent=1 // pred_region
      %145 = vsyncadd [#allocation4], 0
      %s146 = sshll.u32 [#allocation3], 4
      %s147 = int_to_ptr.vmem [resolvable:$true] %s146
      %s148 = sshll.u32 %s5, 4
      %s149 = int_to_ptr.hbm [resolvable:$true] %s148
      %154 = dma.vmem_to_hbm [thread:$0]  %s147, 256, %s149, [#allocation4], 128, 128, 8
    $region33: #{encoder_forward.21} parent=1 // pred_fallthru
      _
    // Predicated region
    $region34: #{encoder_forward.21} parent=1 // pred_check
      _
    $region35: #{encoder_forward.21} parent=1 // pred_check_branch
      %156 = sbr.rel (0) target = $region37
    $region36: #{encoder_forward.21} parent=1 // pred_region
      %158 = dma.done [#allocation4], 256
    $region37: #{encoder_forward.21} parent=1 // pred_fallthru
      _
    %159 = vsyncpa [#allocation4], 1

// kernel: encoder_forward.16
$region0: #{encoder_forward.16}
  #allocation0 [shape = 'u32[]', space=smem, size = 0x4, offset = 0x4, fixed_abs, tag = 'smem constant byte address 0x4 - core index']
  #allocation1 [shape = 'u32[72,128]{1,0:T(1,128)}', space=vmem, size = 0x9000, scoped, tag = 'internal scratch']
  #allocation2 [shape = 'f32[16,32]{1,0:T(8,128)}', space=vmem, size = 0x2000, scoped, tag = 'scratch operand']
  %s0 = inlined_call_operand.vmem [shape: bf16[16,128], index: 0, kind: input, shape index: {}]
  %s1 = inlined_call_operand.vmem [shape: bf16[128,32], index: 1, kind: input, shape index: {}]
  %s2 = inlined_call_operand.vmem [shape: f32[1,32], index: 2, kind: input, shape index: {}]
  %s3 = inlined_call_operand.vmem [shape: f32[16,32], index: 3, kind: input, shape index: {}]
  %s4 = inlined_call_operand.vmem [shape: f32[16,32], index: 4, kind: input, shape index: {}]
  %s5 = inlined_call_operand.vmem [shape: f32[16,32], index: 5, kind: output, shape index: {}]
  %s6 = sld [smem:[#allocation0]]
  $region38: #{encoder_forward.16} parent=0
    _
  %s8 = ssub.s32 1, %s6
  %s9 = scalar_select 0, %s8, %s6
  // Predicated region
  $region2: #{encoder_forward.16} parent=0 // pred_check
    _
  $region3: #{encoder_forward.16} parent=0 // pred_check_branch
    %11 = sbr.rel (0) target = $region5
  $region4: #{encoder_forward.16} parent=0 // pred_region
    _
  $region5: #{encoder_forward.16} parent=0 // pred_fallthru
    _
  // Predicated region
  $region6: #{encoder_forward.16} parent=0 // pred_check
    _
  $region7: #{encoder_forward.16} parent=0 // pred_check_branch
    %13 = sbr.rel (0) target = $region9
  $region8: #{encoder_forward.16} parent=0 // pred_region
    _
  $region9: #{encoder_forward.16} parent=0 // pred_fallthru
    _
  // Predicated region
  $region10: #{encoder_forward.16} parent=0 // pred_check
    _
  $region11: #{encoder_forward.16} parent=0 // pred_check_branch
    %15 = sbr.rel (0) target = $region13
  $region12: #{encoder_forward.16} parent=0 // pred_region
    _
  $region13: #{encoder_forward.16} parent=0 // pred_fallthru
    _
  // Predicated region
  $region14: #{encoder_forward.16} parent=0 // pred_check
    _
  $region15: #{encoder_forward.16} parent=0 // pred_check_branch
    %17 = sbr.rel (0) target = $region17
  $region16: #{encoder_forward.16} parent=0 // pred_region
    _
  $region17: #{encoder_forward.16} parent=0 // pred_fallthru
    _
  // Predicated region
  $region18: #{encoder_forward.16} parent=0 // pred_check
    _
  $region19: #{encoder_forward.16} parent=0 // pred_check_branch
    %19 = sbr.rel (0) target = $region21
  $region20: #{encoder_forward.16} parent=0 // pred_region
    _
  $region21: #{encoder_forward.16} parent=0 // pred_fallthru
    _
  %p20 = scmp.eq.s32.totalorder 0, 0
  // Predicated region
  $region22: #{encoder_forward.16} parent=0 // pred_check
    %p21 = pneg %p20
  $region23: #{encoder_forward.16} parent=0 // pred_check_branch
    %23 = sbr.rel (%p21) target = $region25
  $region24: #{encoder_forward.16} parent=0 // pred_region
    %vm24 = vcmask 261120
    %25 = vst.msk [vmem:[#allocation2] sm:$0xff] %vm24, 0.0
    %26 = vst.msk [vmem:[#allocation2 + $0x8] sm:$0xff] %vm24, 0.0
  $region25: #{encoder_forward.16} parent=0 // pred_fallthru
    _
  %v27 = vld [vmem:[#allocation2] sm:$0xff]
  %v28 = vld [vmem:[#allocation2 + $0x8] sm:$0xff]
  %v29 = vld [vmem:[%s0] sm:$0xf]
  %v30 = vld [vmem:[%s0 + $0x4] sm:$0xf]
  %v31 = vld [vmem:[%s1] sm:$0xf]
  %v32 = vld [vmem:[%s1 + $0x4] sm:$0xf]
  %v33 = vld [vmem:[%s1 + $0x8] sm:$0xf]
  %v34 = vld [vmem:[%s1 + $0xc] sm:$0xf]
  %v35 = vld [vmem:[%s1 + $0x10] sm:$0xf]
  %v36 = vld [vmem:[%s1 + $0x14] sm:$0xf]
  %v37 = vld [vmem:[%s1 + $0x18] sm:$0xf]
  %v38 = vld [vmem:[%s1 + $0x1c] sm:$0xf]
  %v39 = vld [vmem:[%s1 + $0x20] sm:$0xf]
  %v40 = vld [vmem:[%s1 + $0x24] sm:$0xf]
  %v41 = vld [vmem:[%s1 + $0x28] sm:$0xf]
  %v42 = vld [vmem:[%s1 + $0x2c] sm:$0xf]
  %v43 = vld [vmem:[%s1 + $0x30] sm:$0xf]
  %v44 = vld [vmem:[%s1 + $0x34] sm:$0xf]
  %v45 = vld [vmem:[%s1 + $0x38] sm:$0xf]
  %v46 = vld [vmem:[%s1 + $0x3c] sm:$0xf]
  %v49 = vunpack.c.l.b16 %v29
  %v50 = vunpack.c.l.b16 %v30
  %v51 = vpack.c.b16 %v50, %v49
  %v69 = vunpack.c.l.b16 %v31
  %v70 = vunpack.c.l.b16 %v32
  %v71 = vunpack.c.l.b16 %v33
  %v72 = vunpack.c.l.b16 %v34
  %v73 = vunpack.c.l.b16 %v35
  %v74 = vunpack.c.l.b16 %v36
  %v75 = vunpack.c.l.b16 %v37
  %v76 = vunpack.c.l.b16 %v38
  %v77 = vunpack.c.l.b16 %v39
  %v78 = vunpack.c.l.b16 %v40
  %v79 = vunpack.c.l.b16 %v41
  %v80 = vunpack.c.l.b16 %v42
  %v81 = vunpack.c.l.b16 %v43
  %v82 = vunpack.c.l.b16 %v44
  %v83 = vunpack.c.l.b16 %v45
  %v84 = vunpack.c.l.b16 %v46
  %v85 = vpack.c.b16 %v70, %v69
  %v86 = vpack.c.b16 %v72, %v71
  %v87 = vpack.c.b16 %v74, %v73
  %v88 = vpack.c.b16 %v76, %v75
  %v89 = vpack.c.b16 %v78, %v77
  %v90 = vpack.c.b16 %v80, %v79
  %v91 = vpack.c.b16 %v82, %v81
  %v92 = vpack.c.b16 %v84, %v83
  %101 = vmatpush.bf16.msra.mxu0 %v92
  %102 = vmatpush.bf16.msra.mxu0 %v91
  %103 = vmatpush.bf16.msra.mxu0 %v90
  %104 = vmatpush.bf16.msra.mxu0 %v89
  %105 = vmatpush.bf16.msra.mxu0 %v88
  %106 = vmatpush.bf16.msra.mxu0 %v87
  %107 = vmatpush.bf16.msra.mxu0 %v86
  %108 = vmatpush.bf16.msra.mxu0 %v85
  %109 = vmatmul.bf16.gmra.mxu0 %v51
  %v110 = vpop.f32.mrf.mxu0
  %v111 = vadd.f32 0.0, %v110
  %v112 = vpop.f32.mrf.mxu0
  %v113 = vadd.f32 0.0, %v112
  %114 = vdwg.mxu0
  %v115 = vadd.f32 %v27, %v111
  %v116 = vadd.f32 %v28, %v113
  %vm117 = vcmask 261120
  %118 = vst.msk [vmem:[#allocation2] sm:$0xff] %vm117, %v115
  %119 = vst.msk [vmem:[#allocation2 + $0x8] sm:$0xff] %vm117, %v116
  // Predicated region
  $region26: #{encoder_forward.16} parent=0 // pred_check
    %p120 = pneg %p20
  $region27: #{encoder_forward.16} parent=0 // pred_check_branch
    %122 = sbr.rel (%p120) target = $region29
  $region28: #{encoder_forward.16} parent=0 // pred_region
    %v123 = vld [vmem:[#allocation2] sm:$0xff]
    %v124 = vld [vmem:[#allocation2 + $0x8] sm:$0xff]
    %v125 = vld [vmem:[%s2] sm:$0x1]
    %v127 = vperm.slane %v125, 0
    %v129 = vadd.f32 %v123, %v127
    %v130 = vadd.f32 %v124, %v127
    %v131 = vld [vmem:[%s3] sm:$0xff]
    %v132 = vld [vmem:[%s3 + $0x8] sm:$0xff]
    %v133 = vadd.f32 %v129, %v131
    %v134 = vadd.f32 %v130, %v132
    %v135 = vld [vmem:[%s4] sm:$0xff]
    %v136 = vld [vmem:[%s4 + $0x8] sm:$0xff]
    %v137 = vadd.f32 %v133, %v135
    %v138 = vadd.f32 %v134, %v136
    %139 = vst.msk [vmem:[%s5] sm:$0xff] %vm117, %v137
    %140 = vst.msk [vmem:[%s5 + $0x8] sm:$0xff] %vm117, %v138
  $region29: #{encoder_forward.16} parent=0 // pred_fallthru
    _
  // Predicated region
  $region30: #{encoder_forward.16} parent=0 // pred_check
    _
  $region31: #{encoder_forward.16} parent=0 // pred_check_branch
    %142 = sbr.rel (0) target = $region33
  $region32: #{encoder_forward.16} parent=0 // pred_region
    _
  $region33: #{encoder_forward.16} parent=0 // pred_fallthru
    _
  // Predicated region
  $region34: #{encoder_forward.16} parent=0 // pred_check
    _
  $region35: #{encoder_forward.16} parent=0 // pred_check_branch
    %144 = sbr.rel (0) target = $region37
  $region36: #{encoder_forward.16} parent=0 // pred_region
    _
  $region37: #{encoder_forward.16} parent=0 // pred_fallthru
    _

</llo_original>
